<compile_context>
chip_gen: v6e
topology: v6e:2x2x1
jax: 0.10.0
libtpu: 0.0.40
codegen_flags: <defaults>
</compile_context>

<pallas_src>
import functools

import jax
import jax.numpy as jnp
import numpy as np
from jax.experimental import pallas as pl
from jax.experimental.pallas import tpu as pltpu


def _encoder_layer_kernel(
    x_ref, y_ref,                 # (1, tq, D) query rows, (1, Sk, D) key/value rows
    wq_ref, wkv_ref,              # (D, D), (D, 2D)   pre-transposed on host
    g1_ref, be1_ref,              # LayerNorm 1 gamma/beta (1, D)
    w1_ref, b1_ref,               # FFN linear 1: (D, F), (1, F)
    w2_ref, b2_ref,               # FFN linear 2: (F, D), (1, D)
    g2_ref, be2_ref,              # LayerNorm 2 gamma/beta (1, D)
    out_ref, attn_ref,            # (1, tq, D), (1, h, tq, Sk)
    kh_ref, vh_ref,               # VMEM scratch (h, Sk, d_k), persistent across qi
    *, h, d_k, compute_dtype, exact_softmax,
):
    f32 = jnp.float32
    cd = compute_dtype
    D = h * d_k

    # ---- K/V projection: once per batch element, reused across query tiles ----
    @pl.when(pl.program_id(1) == 0)
    def _project_kv():
        yc = y_ref[0].astype(cd)                                      # (Sk, D), single cd staging
        sk = yc.shape[0]
        kv = jnp.dot(yc, wkv_ref[...], preferred_element_type=f32)    # (Sk, 2D): one wide matmul
        k = kv[:, :D]
        v = kv[:, D:]
        kh_ref[...] = jnp.swapaxes(k.reshape(sk, h, d_k), 0, 1).astype(kh_ref.dtype)
        vh_ref[...] = jnp.swapaxes(v.reshape(sk, h, d_k), 0, 1).astype(vh_ref.dtype)

    # ---- Q projection for this query tile (single full-width matmul) ----------
    x = x_ref[0].astype(f32)                                          # (tq, D) residual path
    tq = x.shape[0]
    q = jnp.dot(x.astype(cd), wq_ref[...], preferred_element_type=f32)  # (tq, D)
    qh = jnp.swapaxes(q.reshape(tq, h, d_k), 0, 1)                    # (h, tq, d_k)

    # ---- scaled dot-product attention, heads as the MXU batch dim -------------
    # TODO(synk): attn_mask (masked_fill with -1e9) is not wired in; only the
    # attn_mask=None forward path is implemented.
    scale = jnp.float32(1.0 / np.sqrt(d_k))
    s = jnp.einsum('hqd,hkd->hqk', qh.astype(cd), kh_ref[...],
                   preferred_element_type=f32) * scale                # (h, tq, Sk) f32
    s = s - jnp.max(s, axis=-1, keepdims=True)
    e = jnp.exp(s)
    denom = jnp.sum(e, axis=-1, keepdims=True)
    if exact_softmax:
        p = e / denom                                                 # exact (f32 parity path)
    else:
        p = e * pl.reciprocal(denom, approx=True)                     # EUP slot (fast path)
    attn_ref[0] = p.astype(attn_ref.dtype)                            # one lane-dense store

    ctx_h = jnp.einsum('hqk,hkd->hqd', p.astype(cd), vh_ref[...],
                       preferred_element_type=f32)                    # (h, tq, d_k)
    context = jnp.swapaxes(ctx_h, 0, 1).reshape(tq, D)                # single relayout -> (tq, D)

    def layernorm(z, gamma, beta):
        mu = jnp.mean(z, axis=-1, keepdims=True)
        var = jnp.mean((z - mu) ** 2, axis=-1, keepdims=True)
        return (z - mu) * jax.lax.rsqrt(var + 1e-5) * gamma + beta

    # Add & Norm 1 (dropout == identity in eval mode)
    x1 = layernorm(x + context, g1_ref[0].astype(f32), be1_ref[0].astype(f32))

    # Position-wise FFN: w2(relu(w1(x1))), weights pre-transposed on host.
    hdn = jnp.dot(x1.astype(cd), w1_ref[...], preferred_element_type=f32) + b1_ref[0].astype(f32)
    hdn = jnp.maximum(hdn, 0.0)                                       # (tq, F)
    ff = jnp.dot(hdn.astype(cd), w2_ref[...], preferred_element_type=f32) + b2_ref[0].astype(f32)

    # Add & Norm 2
    out = layernorm(x1 + ff, g2_ref[0].astype(f32), be2_ref[0].astype(f32))
    out_ref[0] = out.astype(out_ref.dtype)


def _vmem_capacity_bytes():
    try:
        return int(pltpu.get_tpu_info().vmem_capacity_bytes)
    except Exception:
        return 64 << 20                      # conservative fallback (v7x per-TensorCore VMEM)


def _vmem_estimate(tq, Sk, D, F, h, attn_bytes, cd_bytes):
    """Working-set estimate for one grid step (includes in-kernel intermediates)."""
    fixed = (2 * Sk * D * 4                  # y input block (double-buffered, f32)
             + 2 * Sk * D * cd_bytes         # persistent K/V head-split scratch
             + (3 * D * D + 2 * D * F) * cd_bytes   # weights (single-buffered)
             + (1 << 20))                    # small params / slack
    per_tile = (4 * tq * D * 4               # x / out blocks (double-buffered)
                + 2 * h * tq * Sk * attn_bytes   # attn output block (double-buffered)
                + 2 * h * tq * Sk * 4        # scores / probs f32 intermediates
                + 3 * tq * D * 4             # q / qh / context
                + 2 * tq * F * 4)            # FFN hidden
    return fixed + per_tile


def _pick_tq(Sq, Sk, D, F, h, attn_bytes, cd_bytes, cap):
    """Largest query tile whose working set fits a fraction of this chip's VMEM."""
    budget = int(cap * 0.6)
    cands = [Sq] + [c for c in (1024, 512, 256, 128, 64, 32, 16, 8)
                    if c < Sq and Sq % c == 0]
    for c in cands:
        if _vmem_estimate(c, Sk, D, F, h, attn_bytes, cd_bytes) <= budget:
            return c
    return cands[-1]


def encoder_layer(x, y, params, *, h, compute_dtype=jnp.bfloat16,
                  attn_dtype=None, tq=None):
    """x: [B, Sq, D], y: [B, Sk, D] float32.

    Returns (output [B, Sq, D] f32, attn [B, h, Sq, Sk] attn_dtype).
    """
    B, Sq, D = x.shape
    Bk, Sk, Dk = y.shape
    assert Bk == B and Dk == D and D % h == 0
    d_k = D // h
    F = params["w1"].shape[0]
    if attn_dtype is None:   # bf16 attn output in the fast path, f32 in the parity path
        attn_dtype = (jnp.float32 if jnp.dtype(compute_dtype) == jnp.dtype(jnp.float32)
                      else jnp.bfloat16)

    # ---- host-side layout plumbing (free in the XLA wrapper) -------------------
    # PyTorch: q = x @ W[:D].T ; k = y @ W[D:2D].T ; v = y @ W[2D:].T
    # (no bias, no output projection -- matches the module's F.linear on in_proj slices).
    W = params["in_proj_weight"]                          # (3D, D)
    wq_t = W[:D].T.astype(compute_dtype)                  # (D, D)
    wkv_t = jnp.concatenate([W[D:2 * D].T, W[2 * D:].T], axis=1).astype(compute_dtype)  # (D, 2D)
    w1_t = params["w1"].T.astype(compute_dtype)           # (D, F)
    w2_t = params["w2"].T.astype(compute_dtype)           # (F, D)

    # ---- generation-aware query tiling & VMEM budget ---------------------------
    cap = _vmem_capacity_bytes()
    attn_bytes = jnp.dtype(attn_dtype).itemsize
    cd_bytes = jnp.dtype(compute_dtype).itemsize
    if tq is None:
        tq = _pick_tq(Sq, Sk, D, F, h, attn_bytes, cd_bytes, cap)
    else:
        assert Sq % tq == 0 and (tq % 8 == 0 or tq == Sq)
    n_q = Sq // tq
    est = _vmem_estimate(tq, Sk, D, F, h, attn_bytes, cd_bytes)
    vmem_limit = int(min(max(int(est * 1.3), 32 << 20), int(cap * 0.9)))
    # TODO(synk): for very large Sk a flash-style kv-block inner loop with online
    # softmax would bound the (h, tq, Sk) score working set further.

    kernel = functools.partial(
        _encoder_layer_kernel, h=h, d_k=d_k, compute_dtype=compute_dtype,
        exact_softmax=bool(jnp.dtype(compute_dtype) == jnp.dtype(jnp.float32)))

    def _const_spec(shape):
        zeros = (0,) * len(shape)
        index_map = lambda b, qi, _z=zeros: _z
        try:    # single-buffer grid-invariant params (no double-buffered weight copies)
            return pl.BlockSpec(shape, index_map, pipeline_mode=pl.Buffered(1))
        except TypeError:
            return pl.BlockSpec(shape, index_map)

    in_specs = [
        pl.BlockSpec((1, tq, D), lambda b, qi: (b, qi, 0)),    # x (query rows)
        pl.BlockSpec((1, Sk, D), lambda b, qi: (b, 0, 0)),     # y (key/value rows)
        _const_spec((D, D)),                                    # Wq^T
        _const_spec((D, 2 * D)),                                # [Wk^T | Wv^T]
        _const_spec((1, D)), _const_spec((1, D)),               # LN1 gamma/beta
        _const_spec((D, F)), _const_spec((1, F)),               # FFN w1^T / b1
        _const_spec((F, D)), _const_spec((1, D)),               # FFN w2^T / b2
        _const_spec((1, D)), _const_spec((1, D)),               # LN2 gamma/beta
    ]
    out_specs = (
        pl.BlockSpec((1, tq, D), lambda b, qi: (b, qi, 0)),
        pl.BlockSpec((1, h, tq, Sk), lambda b, qi: (b, 0, qi, 0)),
    )

    return pl.pallas_call(
        kernel,
        grid=(B, n_q),
        in_specs=in_specs,
        out_specs=out_specs,
        out_shape=(
            jax.ShapeDtypeStruct((B, Sq, D), jnp.float32),
            jax.ShapeDtypeStruct((B, h, Sq, Sk), attn_dtype),
        ),
        scratch_shapes=[
            pltpu.VMEM((h, Sk, d_k), compute_dtype),    # K heads (persist across qi)
            pltpu.VMEM((h, Sk, d_k), compute_dtype),    # V heads (persist across qi)
        ],
        compiler_params=pltpu.CompilerParams(
            dimension_semantics=("parallel", "arbitrary"),
            vmem_limit_bytes=vmem_limit),
    )(
        x, y, wq_t, wkv_t,
        params["ln1_g"], params["ln1_b"],
        w1_t, params["b1"], w2_t, params["b2"],
        params["ln2_g"], params["ln2_b"],
    )


def _reference(x, y, params, *, h):
    """Pure-JAX f32 reference with identical semantics (for correctness check)."""
    B, Sq, D = x.shape
    d_k = D // h
    W = params["in_proj_weight"]
    q = x @ W[:D].T
    k = y @ W[D:2 * D].T
    v = y @ W[2 * D:].T

    def split(t):
        return t.reshape(B, t.shape[1], h, d_k).transpose(0, 2, 1, 3)   # (B, h, S, d_k)

    qh, kh, vh = split(q), split(k), split(v)
    attn = jnp.einsum("bhqd,bhkd->bhqk", qh, kh) / np.sqrt(d_k)
    p = jax.nn.softmax(attn, axis=-1)
    ctx = jnp.einsum("bhqk,bhkd->bhqd", p, vh).transpose(0, 2, 1, 3).reshape(B, Sq, D)

    def ln(z, g, b):
        mu = jnp.mean(z, axis=-1, keepdims=True)
        var = jnp.mean((z - mu) ** 2, axis=-1, keepdims=True)
        return (z - mu) / jnp.sqrt(var + 1e-5) * g + b

    x1 = ln(x + ctx, params["ln1_g"][0], params["ln1_b"][0])
    ff = jnp.maximum(x1 @ params["w1"].T + params["b1"][0], 0.0) @ params["w2"].T + params["b2"][0]
    out = ln(x1 + ff, params["ln2_g"][0], params["ln2_b"][0])
    return out, p


if __name__ == "__main__":
    # small, forward-consistent shapes
    B, S, D, H, FFW = 2, 8, 32, 4, 64

    key = jax.random.PRNGKey(0)
    ks = jax.random.split(key, 10)

    x = jax.random.normal(ks[0], (B, S, D), dtype=jnp.float32)
    y = jax.random.normal(ks[1], (B, S, D), dtype=jnp.float32)

    params = {
        "in_proj_weight": jax.random.normal(ks[2], (3 * D, D), jnp.float32)
                          * np.sqrt(2.0 / D),
        "ln1_g": jnp.ones((1, D), jnp.float32),
        "ln1_b": jnp.zeros((1, D), jnp.float32),
        "w1": jax.random.uniform(ks[3], (FFW, D), jnp.float32,
                                 -1.0 / np.sqrt(D), 1.0 / np.sqrt(D)),
        "b1": jax.random.uniform(ks[4], (1, FFW), jnp.float32,
                                 -1.0 / np.sqrt(D), 1.0 / np.sqrt(D)),
        "w2": jax.random.uniform(ks[5], (D, FFW), jnp.float32,
                                 -1.0 / np.sqrt(FFW), 1.0 / np.sqrt(FFW)),
        "b2": jax.random.uniform(ks[6], (1, D), jnp.float32,
                                 -1.0 / np.sqrt(FFW), 1.0 / np.sqrt(FFW)),
        "ln2_g": jnp.ones((1, D), jnp.float32),
        "ln2_b": jnp.zeros((1, D), jnp.float32),
    }

    ref_out, ref_attn = _reference(x, y, params, h=H)

    # 1) exact-parity path: f32 MXU operands, exact softmax divide, f32 attn output
    out, attn = encoder_layer(x, y, params, h=H, compute_dtype=jnp.float32)
    jax.block_until_ready((out, attn))
    np.testing.assert_allclose(np.asarray(out), np.asarray(ref_out), rtol=5e-3, atol=5e-3)
    np.testing.assert_allclose(np.asarray(attn), np.asarray(ref_attn), rtol=5e-3, atol=5e-3)

    # 2) fast path: bf16 MXU operands with f32 accumulation, bf16 attn output
    out_bf, attn_bf = encoder_layer(x, y, params, h=H, compute_dtype=jnp.bfloat16)
    jax.block_until_ready((out_bf, attn_bf))
    np.testing.assert_allclose(np.asarray(out_bf), np.asarray(ref_out), rtol=8e-2, atol=8e-2)
    np.testing.assert_allclose(np.asarray(attn_bf.astype(jnp.float32)),
                               np.asarray(ref_attn), rtol=8e-2, atol=8e-2)

    # 3) multi-query-tile path: exercises K/V scratch reuse across the qi axis
    S2 = 16
    x2 = jax.random.normal(ks[7], (B, S2, D), dtype=jnp.float32)
    y2 = jax.random.normal(ks[8], (B, S2, D), dtype=jnp.float32)
    ref_out2, ref_attn2 = _reference(x2, y2, params, h=H)
    out2, attn2 = encoder_layer(x2, y2, params, h=H, compute_dtype=jnp.float32, tq=8)
    jax.block_until_ready((out2, attn2))
    np.testing.assert_allclose(np.asarray(out2), np.asarray(ref_out2), rtol=5e-3, atol=5e-3)
    np.testing.assert_allclose(np.asarray(attn2), np.asarray(ref_attn2), rtol=5e-3, atol=5e-3)

    print("KERNEL_OK")
</pallas_src>

<mosaic_0001>
module attributes {stable_mosaic.version = 11 : i64} {
  func.func @_encoder_layer_kernel(%arg0: i32, %arg1: i32, %arg2: memref<1x8x32xf32, #tpu.memory_space<vmem>>, %arg3: memref<1x8x32xf32, #tpu.memory_space<vmem>>, %arg4: memref<32x32xf32, #tpu.memory_space<vmem>>, %arg5: memref<32x64xf32, #tpu.memory_space<vmem>>, %arg6: memref<1x32xf32, #tpu.memory_space<vmem>>, %arg7: memref<1x32xf32, #tpu.memory_space<vmem>>, %arg8: memref<32x64xf32, #tpu.memory_space<vmem>>, %arg9: memref<1x64xf32, #tpu.memory_space<vmem>>, %arg10: memref<64x32xf32, #tpu.memory_space<vmem>>, %arg11: memref<1x32xf32, #tpu.memory_space<vmem>>, %arg12: memref<1x32xf32, #tpu.memory_space<vmem>>, %arg13: memref<1x32xf32, #tpu.memory_space<vmem>>, %arg14: memref<1x8x32xf32, #tpu.memory_space<vmem>>, %arg15: memref<1x4x8x8xf32, #tpu.memory_space<vmem>>, %arg16: memref<4x8x8xf32, #tpu.memory_space<vmem>>, %arg17: memref<4x8x8xf32, #tpu.memory_space<vmem>>) attributes {dimension_semantics = [#tpu.dimension_semantics<parallel>, #tpu.dimension_semantics<arbitrary>], iteration_bounds = array<i64: 2, 1>, scalar_prefetch = 0 : i64, scratch_operands = 2 : i64, tpu.core_type = #tpu.core_type<tc>, window_params = [{transform_indices = @transform_0, window_bounds = array<i64: 1, 8, 32>}, {transform_indices = @transform_1, window_bounds = array<i64: 1, 8, 32>}, {pipeline_mode = #tpu.pipeline_mode<synchronous>, transform_indices = @transform_2, window_bounds = array<i64: 32, 32>}, {pipeline_mode = #tpu.pipeline_mode<synchronous>, transform_indices = @transform_3, window_bounds = array<i64: 32, 64>}, {pipeline_mode = #tpu.pipeline_mode<synchronous>, transform_indices = @transform_4, window_bounds = array<i64: 1, 32>}, {pipeline_mode = #tpu.pipeline_mode<synchronous>, transform_indices = @transform_5, window_bounds = array<i64: 1, 32>}, {pipeline_mode = #tpu.pipeline_mode<synchronous>, transform_indices = @transform_6, window_bounds = array<i64: 32, 64>}, {pipeline_mode = #tpu.pipeline_mode<synchronous>, transform_indices = @transform_7, window_bounds = array<i64: 1, 64>}, {pipeline_mode = #tpu.pipeline_mode<synchronous>, transform_indices = @transform_8, window_bounds = array<i64: 64, 32>}, {pipeline_mode = #tpu.pipeline_mode<synchronous>, transform_indices = @transform_9, window_bounds = array<i64: 1, 32>}, {pipeline_mode = #tpu.pipeline_mode<synchronous>, transform_indices = @transform_10, window_bounds = array<i64: 1, 32>}, {pipeline_mode = #tpu.pipeline_mode<synchronous>, transform_indices = @transform_11, window_bounds = array<i64: 1, 32>}, {transform_indices = @transform_12, window_bounds = array<i64: 1, 8, 32>}, {transform_indices = @transform_13, window_bounds = array<i64: 1, 4, 8, 8>}]} {
    %c0_i32 = arith.constant 0 : i32
    %0 = arith.cmpi eq, %arg1, %c0_i32 : i32
    %1 = arith.extui %0 : i1 to i32
    %c0_i32_0 = arith.constant 0 : i32
    %2 = arith.cmpi ne, %1, %c0_i32_0 : i32
    scf.if %2 {
      %c0_52 = arith.constant 0 : index
      %c0_53 = arith.constant 0 : index
      %c0_54 = arith.constant 0 : index
      %106 = vector.load %arg3[%c0_52, %c0_53, %c0_54] : memref<1x8x32xf32, #tpu.memory_space<vmem>>, vector<1x8x32xf32>
      %107 = vector.shape_cast %106 : vector<1x8x32xf32> to vector<8x32xf32>
      %c0_55 = arith.constant 0 : index
      %c0_56 = arith.constant 0 : index
      %108 = vector.load %arg5[%c0_55, %c0_56] : memref<32x64xf32, #tpu.memory_space<vmem>>, vector<32x64xf32>
      %cst_57 = arith.constant dense<0.000000e+00> : vector<8x64xf32>
      %109 = tpu.matmul %107, %108, %cst_57 {dimension_numbers = #tpu.dot_dimension_numbers<[1], [0], [0], [1], [0, 0, 1, 1], [], []>} : vector<8x32xf32>, vector<32x64xf32>, vector<8x64xf32> -> vector<8x64xf32>
      %110 = vector.extract_strided_slice %109 {offsets = [0, 0], sizes = [8, 32], strides = [1, 1]} : vector<8x64xf32> to vector<8x32xf32>
      %111 = vector.extract_strided_slice %109 {offsets = [0, 32], sizes = [8, 32], strides = [1, 1]} : vector<8x64xf32> to vector<8x32xf32>
      %112 = vector.shape_cast %110 : vector<8x32xf32> to vector<8x4x8xf32>
      %113 = tpu.transpose %112, [1, 0, 2] : vector<8x4x8xf32> -> vector<4x8x8xf32>
      %c0_58 = arith.constant 0 : index
      %c0_59 = arith.constant 0 : index
      %c0_60 = arith.constant 0 : index
      %114 = vector.load %arg16[%c0_58, %c0_59, %c0_60] : memref<4x8x8xf32, #tpu.memory_space<vmem>>, vector<4x8x8xf32>
      tpu.vector_store %arg16[%c0_58, %c0_59, %c0_60], %113 {strides = array<i32>} : memref<4x8x8xf32, #tpu.memory_space<vmem>>, vector<4x8x8xf32>,
      %115 = vector.shape_cast %111 : vector<8x32xf32> to vector<8x4x8xf32>
      %116 = tpu.transpose %115, [1, 0, 2] : vector<8x4x8xf32> -> vector<4x8x8xf32>
      %c0_61 = arith.constant 0 : index
      %c0_62 = arith.constant 0 : index
      %c0_63 = arith.constant 0 : index
      %117 = vector.load %arg17[%c0_61, %c0_62, %c0_63] : memref<4x8x8xf32, #tpu.memory_space<vmem>>, vector<4x8x8xf32>
      tpu.vector_store %arg17[%c0_61, %c0_62, %c0_63], %116 {strides = array<i32>} : memref<4x8x8xf32, #tpu.memory_space<vmem>>, vector<4x8x8xf32>,
    } else {
    }
    %c0 = arith.constant 0 : index
    %c0_1 = arith.constant 0 : index
    %c0_2 = arith.constant 0 : index
    %3 = vector.load %arg2[%c0, %c0_1, %c0_2] : memref<1x8x32xf32, #tpu.memory_space<vmem>>, vector<1x8x32xf32>
    %4 = vector.shape_cast %3 : vector<1x8x32xf32> to vector<8x32xf32>
    %c0_3 = arith.constant 0 : index
    %c0_4 = arith.constant 0 : index
    %5 = vector.load %arg4[%c0_3, %c0_4] : memref<32x32xf32, #tpu.memory_space<vmem>>, vector<32x32xf32>
    %cst = arith.constant dense<0.000000e+00> : vector<8x32xf32>
    %6 = tpu.matmul %4, %5, %cst {dimension_numbers = #tpu.dot_dimension_numbers<[1], [0], [0], [1], [0, 0, 1, 1], [], []>} : vector<8x32xf32>, vector<32x32xf32>, vector<8x32xf32> -> vector<8x32xf32>
    %7 = vector.shape_cast %6 : vector<8x32xf32> to vector<8x4x8xf32>
    %8 = tpu.transpose %7, [1, 0, 2] : vector<8x4x8xf32> -> vector<4x8x8xf32>
    %c0_5 = arith.constant 0 : index
    %c0_6 = arith.constant 0 : index
    %c0_7 = arith.constant 0 : index
    %9 = vector.load %arg16[%c0_5, %c0_6, %c0_7] : memref<4x8x8xf32, #tpu.memory_space<vmem>>, vector<4x8x8xf32>
    "tpu.trace_start"() <{level = 10 : i32, message = "hqd,hkd->hqk"}> : () -> ()
    %cst_8 = arith.constant dense<0.000000e+00> : vector<4x8x8xf32>
    %10 = tpu.matmul %8, %9, %cst_8 {dimension_numbers = #tpu.dot_dimension_numbers<[2], [2], [1], [1], [0, 0, 0, 1, 1, 1], [0], [0]>} : vector<4x8x8xf32>, vector<4x8x8xf32>, vector<4x8x8xf32> -> vector<4x8x8xf32>
    "tpu.trace_stop"() : () -> ()
    %cst_9 = arith.constant 0.353553385 : f32
    %11 = vector.broadcast %cst_9 : f32 to vector<4x8x8xf32>
    %12 = arith.mulf %10, %11 : vector<4x8x8xf32>
    %cst_10 = arith.constant dense<0xFF800000> : vector<4x8xf32>
    %13 = vector.multi_reduction <maximumf>, %12, %cst_10 [2] : vector<4x8x8xf32> to vector<4x8xf32>
    %14 = vector.shape_cast %13 : vector<4x8xf32> to vector<4x8x1xf32>
    %15 = vector.broadcast %14 : vector<4x8x1xf32> to vector<4x8x8xf32>
    %16 = arith.subf %12, %15 : vector<4x8x8xf32>
    %17 = math.exp %16 : vector<4x8x8xf32>
    %cst_11 = arith.constant dense<0.000000e+00> : vector<4x8xf32>
    %18 = vector.multi_reduction <add>, %17, %cst_11 [2] : vector<4x8x8xf32> to vector<4x8xf32>
    %19 = vector.shape_cast %18 : vector<4x8xf32> to vector<4x8x1xf32>
    %20 = vector.broadcast %19 : vector<4x8x1xf32> to vector<4x8x8xf32>
    %21 = arith.divf %17, %20 : vector<4x8x8xf32>
    %c0_12 = arith.constant 0 : index
    %c0_13 = arith.constant 0 : index
    %c0_14 = arith.constant 0 : index
    %c0_15 = arith.constant 0 : index
    %22 = vector.load %arg15[%c0_12, %c0_13, %c0_14, %c0_15] : memref<1x4x8x8xf32, #tpu.memory_space<vmem>>, vector<1x4x8x8xf32>
    %23 = vector.shape_cast %22 : vector<1x4x8x8xf32> to vector<4x8x8xf32>
    %24 = vector.shape_cast %21 : vector<4x8x8xf32> to vector<1x4x8x8xf32>
    tpu.vector_store %arg15[%c0_12, %c0_13, %c0_14, %c0_15], %24 {strides = array<i32>} : memref<1x4x8x8xf32, #tpu.memory_space<vmem>>, vector<1x4x8x8xf32>,
    %c0_16 = arith.constant 0 : index
    %c0_17 = arith.constant 0 : index
    %c0_18 = arith.constant 0 : index
    %25 = vector.load %arg17[%c0_16, %c0_17, %c0_18] : memref<4x8x8xf32, #tpu.memory_space<vmem>>, vector<4x8x8xf32>
    "tpu.trace_start"() <{level = 10 : i32, message = "hqk,hkd->hqd"}> : () -> ()
    %cst_19 = arith.constant dense<0.000000e+00> : vector<4x8x8xf32>
    %26 = tpu.matmul %21, %25, %cst_19 {dimension_numbers = #tpu.dot_dimension_numbers<[2], [1], [1], [2], [0, 0, 0, 1, 1, 2], [0], [0]>} : vector<4x8x8xf32>, vector<4x8x8xf32>, vector<4x8x8xf32> -> vector<4x8x8xf32>
    "tpu.trace_stop"() : () -> ()
    %27 = tpu.transpose %26, [1, 0, 2] : vector<4x8x8xf32> -> vector<8x4x8xf32>
    %28 = vector.shape_cast %27 : vector<8x4x8xf32> to vector<8x32xf32>
    %29 = arith.addf %4, %28 : vector<8x32xf32>
    %c0_20 = arith.constant 0 : index
    %c0_21 = arith.constant 0 : index
    %30 = vector.load %arg6[%c0_20, %c0_21] : memref<1x32xf32, #tpu.memory_space<vmem>>, vector<1x32xf32>
    %31 = vector.shape_cast %30 : vector<1x32xf32> to vector<32xf32>
    %c0_22 = arith.constant 0 : index
    %c0_23 = arith.constant 0 : index
    %32 = vector.load %arg7[%c0_22, %c0_23] : memref<1x32xf32, #tpu.memory_space<vmem>>, vector<1x32xf32>
    %33 = vector.shape_cast %32 : vector<1x32xf32> to vector<32xf32>
    %cst_24 = arith.constant dense<0.000000e+00> : vector<8xf32>
    %34 = vector.multi_reduction <add>, %29, %cst_24 [1] : vector<8x32xf32> to vector<8xf32>
    %35 = vector.shape_cast %34 : vector<8xf32> to vector<8x1xf32>
    %cst_25 = arith.constant 3.200000e+01 : f32
    %36 = vector.broadcast %cst_25 : f32 to vector<8x1xf32>
    %37 = arith.divf %35, %36 : vector<8x1xf32>
    %38 = vector.broadcast %37 : vector<8x1xf32> to vector<8x32xf32>
    %39 = arith.subf %29, %38 : vector<8x32xf32>
    %40 = arith.mulf %39, %39 : vector<8x32xf32>
    %cst_26 = arith.constant dense<0.000000e+00> : vector<8xf32>
    %41 = vector.multi_reduction <add>, %40, %cst_26 [1] : vector<8x32xf32> to vector<8xf32>
    %42 = vector.shape_cast %41 : vector<8xf32> to vector<8x1xf32>
    %cst_27 = arith.constant 3.200000e+01 : f32
    %43 = vector.broadcast %cst_27 : f32 to vector<8x1xf32>
    %44 = arith.divf %42, %43 : vector<8x1xf32>
    %45 = vector.broadcast %37 : vector<8x1xf32> to vector<8x32xf32>
    %46 = arith.subf %29, %45 : vector<8x32xf32>
    %cst_28 = arith.constant 9.99999974E-6 : f32
    %47 = vector.broadcast %cst_28 : f32 to vector<8x1xf32>
    %48 = arith.addf %44, %47 : vector<8x1xf32>
    %49 = math.rsqrt %48 : vector<8x1xf32>
    %50 = vector.broadcast %49 : vector<8x1xf32> to vector<8x32xf32>
    %51 = arith.mulf %46, %50 : vector<8x32xf32>
    %52 = vector.shape_cast %31 : vector<32xf32> to vector<1x32xf32>
    %53 = vector.broadcast %52 : vector<1x32xf32> to vector<8x32xf32>
    %54 = arith.mulf %51, %53 : vector<8x32xf32>
    %55 = vector.shape_cast %33 : vector<32xf32> to vector<1x32xf32>
    %56 = vector.broadcast %55 : vector<1x32xf32> to vector<8x32xf32>
    %57 = arith.addf %54, %56 : vector<8x32xf32>
    %c0_29 = arith.constant 0 : index
    %c0_30 = arith.constant 0 : index
    %58 = vector.load %arg8[%c0_29, %c0_30] : memref<32x64xf32, #tpu.memory_space<vmem>>, vector<32x64xf32>
    %cst_31 = arith.constant dense<0.000000e+00> : vector<8x64xf32>
    %59 = tpu.matmul %57, %58, %cst_31 {dimension_numbers = #tpu.dot_dimension_numbers<[1], [0], [0], [1], [0, 0, 1, 1], [], []>} : vector<8x32xf32>, vector<32x64xf32>, vector<8x64xf32> -> vector<8x64xf32>
    %c0_32 = arith.constant 0 : index
    %c0_33 = arith.constant 0 : index
    %60 = vector.load %arg9[%c0_32, %c0_33] : memref<1x64xf32, #tpu.memory_space<vmem>>, vector<1x64xf32>
    %61 = vector.shape_cast %60 : vector<1x64xf32> to vector<64xf32>
    %62 = vector.shape_cast %61 : vector<64xf32> to vector<1x64xf32>
    %63 = vector.broadcast %62 : vector<1x64xf32> to vector<8x64xf32>
    %64 = arith.addf %59, %63 : vector<8x64xf32>
    %cst_34 = arith.constant 0.000000e+00 : f32
    %65 = vector.broadcast %cst_34 : f32 to vector<8x64xf32>
    %66 = arith.maximumf %64, %65 : vector<8x64xf32>
    %c0_35 = arith.constant 0 : index
    %c0_36 = arith.constant 0 : index
    %67 = vector.load %arg10[%c0_35, %c0_36] : memref<64x32xf32, #tpu.memory_space<vmem>>, vector<64x32xf32>
    %cst_37 = arith.constant dense<0.000000e+00> : vector<8x32xf32>
    %68 = tpu.matmul %66, %67, %cst_37 {dimension_numbers = #tpu.dot_dimension_numbers<[1], [0], [0], [1], [0, 0, 1, 1], [], []>} : vector<8x64xf32>, vector<64x32xf32>, vector<8x32xf32> -> vector<8x32xf32>
    %c0_38 = arith.constant 0 : index
    %c0_39 = arith.constant 0 : index
    %69 = vector.load %arg11[%c0_38, %c0_39] : memref<1x32xf32, #tpu.memory_space<vmem>>, vector<1x32xf32>
    %70 = vector.shape_cast %69 : vector<1x32xf32> to vector<32xf32>
    %71 = vector.shape_cast %70 : vector<32xf32> to vector<1x32xf32>
    %72 = vector.broadcast %71 : vector<1x32xf32> to vector<8x32xf32>
    %73 = arith.addf %68, %72 : vector<8x32xf32>
    %74 = arith.addf %57, %73 : vector<8x32xf32>
    %c0_40 = arith.constant 0 : index
    %c0_41 = arith.constant 0 : index
    %75 = vector.load %arg12[%c0_40, %c0_41] : memref<1x32xf32, #tpu.memory_space<vmem>>, vector<1x32xf32>
    %76 = vector.shape_cast %75 : vector<1x32xf32> to vector<32xf32>
    %c0_42 = arith.constant 0 : index
    %c0_43 = arith.constant 0 : index
    %77 = vector.load %arg13[%c0_42, %c0_43] : memref<1x32xf32, #tpu.memory_space<vmem>>, vector<1x32xf32>
    %78 = vector.shape_cast %77 : vector<1x32xf32> to vector<32xf32>
    %cst_44 = arith.constant dense<0.000000e+00> : vector<8xf32>
    %79 = vector.multi_reduction <add>, %74, %cst_44 [1] : vector<8x32xf32> to vector<8xf32>
    %80 = vector.shape_cast %79 : vector<8xf32> to vector<8x1xf32>
    %cst_45 = arith.constant 3.200000e+01 : f32
    %81 = vector.broadcast %cst_45 : f32 to vector<8x1xf32>
    %82 = arith.divf %80, %81 : vector<8x1xf32>
    %83 = vector.broadcast %82 : vector<8x1xf32> to vector<8x32xf32>
    %84 = arith.subf %74, %83 : vector<8x32xf32>
    %85 = arith.mulf %84, %84 : vector<8x32xf32>
    %cst_46 = arith.constant dense<0.000000e+00> : vector<8xf32>
    %86 = vector.multi_reduction <add>, %85, %cst_46 [1] : vector<8x32xf32> to vector<8xf32>
    %87 = vector.shape_cast %86 : vector<8xf32> to vector<8x1xf32>
    %cst_47 = arith.constant 3.200000e+01 : f32
    %88 = vector.broadcast %cst_47 : f32 to vector<8x1xf32>
    %89 = arith.divf %87, %88 : vector<8x1xf32>
    %90 = vector.broadcast %82 : vector<8x1xf32> to vector<8x32xf32>
    %91 = arith.subf %74, %90 : vector<8x32xf32>
    %cst_48 = arith.constant 9.99999974E-6 : f32
    %92 = vector.broadcast %cst_48 : f32 to vector<8x1xf32>
    %93 = arith.addf %89, %92 : vector<8x1xf32>
    %94 = math.rsqrt %93 : vector<8x1xf32>
    %95 = vector.broadcast %94 : vector<8x1xf32> to vector<8x32xf32>
    %96 = arith.mulf %91, %95 : vector<8x32xf32>
    %97 = vector.shape_cast %76 : vector<32xf32> to vector<1x32xf32>
    %98 = vector.broadcast %97 : vector<1x32xf32> to vector<8x32xf32>
    %99 = arith.mulf %96, %98 : vector<8x32xf32>
    %100 = vector.shape_cast %78 : vector<32xf32> to vector<1x32xf32>
    %101 = vector.broadcast %100 : vector<1x32xf32> to vector<8x32xf32>
    %102 = arith.addf %99, %101 : vector<8x32xf32>
    %c0_49 = arith.constant 0 : index
    %c0_50 = arith.constant 0 : index
    %c0_51 = arith.constant 0 : index
    %103 = vector.load %arg14[%c0_49, %c0_50, %c0_51] : memref<1x8x32xf32, #tpu.memory_space<vmem>>, vector<1x8x32xf32>
    %104 = vector.shape_cast %103 : vector<1x8x32xf32> to vector<8x32xf32>
    %105 = vector.shape_cast %102 : vector<8x32xf32> to vector<1x8x32xf32>
    tpu.vector_store %arg14[%c0_49, %c0_50, %c0_51], %105 {strides = array<i32>} : memref<1x8x32xf32, #tpu.memory_space<vmem>>, vector<1x8x32xf32>,
    return
  }
  func.func @transform_0(%arg0: i32, %arg1: i32) -> (i32, i32, i32) {
    %c0_i32 = arith.constant 0 : i32
    %c0_i32_0 = arith.constant 0 : i32
    return %arg0, %arg1, %c0_i32 : i32, i32, i32
  }
  func.func @transform_1(%arg0: i32, %arg1: i32) -> (i32, i32, i32) {
    %c0_i32 = arith.constant 0 : i32
    %c0_i32_0 = arith.constant 0 : i32
    %c0_i32_1 = arith.constant 0 : i32
    return %arg0, %c0_i32, %c0_i32_0 : i32, i32, i32
  }
  func.func @transform_2(%arg0: i32, %arg1: i32) -> (i32, i32) {
    %c0_i32 = arith.constant 0 : i32
    %c0_i32_0 = arith.constant 0 : i32
    %c0_i32_1 = arith.constant 0 : i32
    return %c0_i32, %c0_i32_0 : i32, i32
  }
  func.func @transform_3(%arg0: i32, %arg1: i32) -> (i32, i32) {
    %c0_i32 = arith.constant 0 : i32
    %c0_i32_0 = arith.constant 0 : i32
    %c0_i32_1 = arith.constant 0 : i32
    return %c0_i32, %c0_i32_0 : i32, i32
  }
  func.func @transform_4(%arg0: i32, %arg1: i32) -> (i32, i32) {
    %c0_i32 = arith.constant 0 : i32
    %c0_i32_0 = arith.constant 0 : i32
    %c0_i32_1 = arith.constant 0 : i32
    return %c0_i32, %c0_i32_0 : i32, i32
  }
  func.func @transform_5(%arg0: i32, %arg1: i32) -> (i32, i32) {
    %c0_i32 = arith.constant 0 : i32
    %c0_i32_0 = arith.constant 0 : i32
    %c0_i32_1 = arith.constant 0 : i32
    return %c0_i32, %c0_i32_0 : i32, i32
  }
  func.func @transform_6(%arg0: i32, %arg1: i32) -> (i32, i32) {
    %c0_i32 = arith.constant 0 : i32
    %c0_i32_0 = arith.constant 0 : i32
    %c0_i32_1 = arith.constant 0 : i32
    return %c0_i32, %c0_i32_0 : i32, i32
  }
  func.func @transform_7(%arg0: i32, %arg1: i32) -> (i32, i32) {
    %c0_i32 = arith.constant 0 : i32
    %c0_i32_0 = arith.constant 0 : i32
    %c0_i32_1 = arith.constant 0 : i32
    return %c0_i32, %c0_i32_0 : i32, i32
  }
  func.func @transform_8(%arg0: i32, %arg1: i32) -> (i32, i32) {
    %c0_i32 = arith.constant 0 : i32
    %c0_i32_0 = arith.constant 0 : i32
    %c0_i32_1 = arith.constant 0 : i32
    return %c0_i32, %c0_i32_0 : i32, i32
  }
  func.func @transform_9(%arg0: i32, %arg1: i32) -> (i32, i32) {
    %c0_i32 = arith.constant 0 : i32
    %c0_i32_0 = arith.constant 0 : i32
    %c0_i32_1 = arith.constant 0 : i32
    return %c0_i32, %c0_i32_0 : i32, i32
  }
  func.func @transform_10(%arg0: i32, %arg1: i32) -> (i32, i32) {
    %c0_i32 = arith.constant 0 : i32
    %c0_i32_0 = arith.constant 0 : i32
    %c0_i32_1 = arith.constant 0 : i32
    return %c0_i32, %c0_i32_0 : i32, i32
  }
  func.func @transform_11(%arg0: i32, %arg1: i32) -> (i32, i32) {
    %c0_i32 = arith.constant 0 : i32
    %c0_i32_0 = arith.constant 0 : i32
    %c0_i32_1 = arith.constant 0 : i32
    return %c0_i32, %c0_i32_0 : i32, i32
  }
  func.func @transform_12(%arg0: i32, %arg1: i32) -> (i32, i32, i32) {
    %c0_i32 = arith.constant 0 : i32
    %c0_i32_0 = arith.constant 0 : i32
    return %arg0, %arg1, %c0_i32 : i32, i32, i32
  }
  func.func @transform_13(%arg0: i32, %arg1: i32) -> (i32, i32, i32, i32) {
    %c0_i32 = arith.constant 0 : i32
    %c0_i32_0 = arith.constant 0 : i32
    %c0_i32_1 = arith.constant 0 : i32
    return %arg0, %c0_i32, %arg1, %c0_i32_0 : i32, i32, i32, i32
  }
}

</mosaic_0001>

<llo_original>
// kernel: tpu_custom_call.1
$region0: #{tpu_custom_call.1}
  #allocation0 [shape = 'u32[]', space=smem, size = 0x4, offset = 0x4, fixed_abs, tag = 'smem constant byte address 0x4 - core index']
  #allocation1 [shape = 'u32[144,128]{1,0:T(1,128)}', space=vmem, size = 0x12000, scoped, tag = 'internal scratch']
  #allocation2 [shape = 'f32[4,8,8]{2,1,0:T(8,128)}', space=vmem, size = 0x4000, scoped, tag = 'scratch operand']
  #allocation3 [shape = 'f32[4,8,8]{2,1,0:T(8,128)}', space=vmem, size = 0x4000, scoped, tag = 'scratch operand']
  %s0 = inlined_call_operand.hbm [shape: f32[2,8,32], index: 0, kind: input, shape index: {}]
  %s1 = inlined_call_operand.hbm [shape: f32[2,8,32], index: 1, kind: input, shape index: {}]
  %s2 = inlined_call_operand.vmem [shape: f32[32,32], index: 2, kind: input, shape index: {}]
  %s3 = inlined_call_operand.vmem [shape: f32[32,64], index: 3, kind: input, shape index: {}]
  %s4 = inlined_call_operand.vmem [shape: f32[1,32], index: 4, kind: input, shape index: {}]
  %s5 = inlined_call_operand.vmem [shape: f32[1,32], index: 5, kind: input, shape index: {}]
  %s6 = inlined_call_operand.vmem [shape: f32[32,64], index: 6, kind: input, shape index: {}]
  %s7 = inlined_call_operand.vmem [shape: f32[1,64], index: 7, kind: input, shape index: {}]
  %s8 = inlined_call_operand.vmem [shape: f32[64,32], index: 8, kind: input, shape index: {}]
  %s9 = inlined_call_operand.vmem [shape: f32[1,32], index: 9, kind: input, shape index: {}]
  %s10 = inlined_call_operand.vmem [shape: f32[1,32], index: 10, kind: input, shape index: {}]
  %s11 = inlined_call_operand.vmem [shape: f32[1,32], index: 11, kind: input, shape index: {}]
  %s12 = inlined_call_operand.hbm [shape: f32[2,8,32], index: 12, kind: output, shape index: {0}]
  %s13 = inlined_call_operand.hbm [shape: f32[2,4,8,8], index: 13, kind: output, shape index: {1}]
  %14 = xla_tuple %s12, %s13
  %s15 = sld [smem:[#allocation0]]
  $region101: #{tpu_custom_call.1} parent=0
    _
  %s17 = ssub.s32 1, %s15
  %s18 = scalar_select 0, %s17, %s15
  $region1: #{tpu_custom_call.1} parent=0
    #allocation4 [shape = 'u8[8192]{0}', space=vmem, size = 0x2000, scoped, tag = 'input window, operand 0']
    #allocation5 [shape = 's32[2]{0}', space=sflag, size = 0x8, scoped, tag = 'scoped memory for tpu_custom_call.1']
    #allocation6 [shape = 's32[2]{0}', space=sflag, size = 0x8, scoped, tag = 'scoped memory for tpu_custom_call.1']
    #allocation7 [shape = 'u8[8192]{0}', space=vmem, size = 0x2000, scoped, tag = 'input window, operand 1']
    #allocation8 [shape = 's32[2]{0}', space=sflag, size = 0x8, scoped, tag = 'scoped memory for tpu_custom_call.1']
    #allocation9 [shape = 'u8[8192]{0}', space=vmem, size = 0x2000, scoped, tag = 'output window, operand 0']
    #allocation10 [shape = 'u8[32768]{0}', space=vmem, size = 0x8000, scoped, tag = 'output window, operand 1']
    #allocation11 [shape = 's32[2]{0}', space=sflag, size = 0x8, scoped, tag = 'scoped memory for tpu_custom_call.1']
    %19 = vsyncpa [#allocation5], 0
    %s20 = scalar_lea.sflag [#allocation5], 1
    %21 = vsyncpa %s20, 0
    %22 = vsyncpa [#allocation8], 0
    %s23 = scalar_lea.sflag [#allocation8], 1
    %24 = vsyncpa %s23, 0
    %25 = vsyncpa [#allocation6], 0
    %s26 = scalar_lea.sflag [#allocation6], 1
    %27 = vsyncpa %s26, 0
    %28 = vsyncpa [#allocation11], 0
    %s29 = scalar_lea.sflag [#allocation11], 1
    %30 = vsyncpa %s29, 0
    loop: start=0, step=1, limit=4
    $region2: #{tpu_custom_call.1} parent=1 // loop_pre_header
      _
    $region3: #{tpu_custom_call.1} parent=1 // loop_header
      %s32 = sphi 0, %s36
      %p33 = scmp.ge.s32.totalorder %s32, 4
      %s39 = sphi 0, %s51
      %s40 = sphi 0, %s47
      %s41 = sphi 0, %s39
      %s42 = sphi 0, %s40
      %s43 = sphi 0, %s41
      %s44 = sphi 0, %s42
      %s56 = sphi 0, %s58
      %s59 = sphi 0, %s56
      %s60 = sphi 0, %s59
      %s76 = sphi 0, %s60
      %s82 = sphi 0, %s84
      %s85 = sphi 0, %s82
      %s86 = sphi 0, %s85
      %s102 = sphi 0, %s86
      %s106 = sphi 0, %s106
      %s108 = sphi 0, %s106
      %s109 = sphi 0, %s108
      %s123 = sphi 0, %s109
      %s127 = sphi 0, %s127
      %s129 = sphi 0, %s127
      %s130 = sphi 0, %s129
      %s144 = sphi 0, %s130
      %s148 = sphi 0, %s148
      %s150 = sphi 0, %s148
      %s151 = sphi 0, %s150
      %s165 = sphi 0, %s151
      %s169 = sphi 0, %s169
      %s171 = sphi 0, %s169
      %s172 = sphi 0, %s171
      %s186 = sphi 0, %s172
      %s190 = sphi 0, %s190
      %s192 = sphi 0, %s190
      %s193 = sphi 0, %s192
      %s207 = sphi 0, %s193
      %s211 = sphi 0, %s211
      %s213 = sphi 0, %s211
      %s214 = sphi 0, %s213
      %s228 = sphi 0, %s214
      %s232 = sphi 0, %s232
      %s234 = sphi 0, %s232
      %s235 = sphi 0, %s234
      %s249 = sphi 0, %s235
      %s253 = sphi 0, %s253
      %s255 = sphi 0, %s253
      %s256 = sphi 0, %s255
      %s270 = sphi 0, %s256
      %s274 = sphi 0, %s274
      %s276 = sphi 0, %s274
      %s277 = sphi 0, %s276
      %s291 = sphi 0, %s277
      %s295 = sphi 0, %s295
      %s297 = sphi 0, %s295
      %s298 = sphi 0, %s297
      %s312 = sphi 0, %s298
      %s320 = sphi 0, %s322
      %s323 = sphi 0, %s320
      %s324 = sphi 0, %s323
      %s340 = sphi 0, %s324
      %s348 = sphi 0, %s350
      %s351 = sphi 0, %s348
      %s352 = sphi 0, %s351
      %s368 = sphi 0, %s352
    $region4: #{tpu_custom_call.1} parent=1 // loop_header_branch
      %35 = sbr.rel (%p33) target = $region8
    $region5: #{tpu_custom_call.1} parent=1 // loop_body
      %s37 = ssub.s32 %s32, 1
      %s38 = ssub.s32 %s32, 2
      %s45 = sadd.s32 1, %s40
      %p46 = scmp.ge.s32.totalorder %s45, 1
      %s47 = scalar_select %p46, 0, %s45
      %s48 = sadd.s32 1, %s39
      %s49 = scalar_select %p46, %s48, %s39
      %p50 = scmp.ge.s32.totalorder %s49, 2
      %s51 = scalar_select %p50, 0, %s49
      %s52 = ssub.s32 %s39, %s51
      %s53 = ssub.s32 %s40, %s47
      %s54 = sor.u32 %s52, %s53
      %p55 = scmp.eq.s32.totalorder %s54, 0
      %s57 = sadd.s32 %s56, 1
      %s58 = scalar_select %p55, %s56, %s57
      %p61 = pneg %p55
      %p62 = scmp.eq.s32.totalorder %s32, 1
      %p63 = por %p61, %p62
      %p64 = scmp.ne.s32.totalorder %s56, %s59
      %p65 = scmp.eq.s32.totalorder %s32, 0
      %p66 = por %p64, %p65
      %p67 = scmp.ne.s32.totalorder %s56, %s59
      %p68 = scmp.eq.s32.totalorder %s37, 1
      %p69 = por %p67, %p68
      %p70 = scmp.ne.s32.totalorder %s59, %s60
      %p71 = scmp.eq.s32.totalorder %s37, 0
      %p72 = por %p70, %p71
      %p73 = scmp.ne.s32.totalorder %s59, %s60
      %p74 = scmp.eq.s32.totalorder %s38, 1
      %p75 = por %p73, %p74
      %p77 = scmp.ne.s32.totalorder %s60, %s76
      %p78 = scmp.eq.s32.totalorder %s38, 0
      %p79 = por %p77, %p78
      %s80 = ssub.s32 %s39, %s51
      %p81 = scmp.eq.s32.totalorder %s80, 0
      %s83 = sadd.s32 %s82, 1
      %s84 = scalar_select %p81, %s82, %s83
      %p87 = pneg %p81
      %p88 = scmp.eq.s32.totalorder %s32, 1
      %p89 = por %p87, %p88
      %p90 = scmp.ne.s32.totalorder %s82, %s85
      %p91 = scmp.eq.s32.totalorder %s32, 0
      %p92 = por %p90, %p91
      %p93 = scmp.ne.s32.totalorder %s82, %s85
      %p94 = scmp.eq.s32.totalorder %s37, 1
      %p95 = por %p93, %p94
      %p96 = scmp.ne.s32.totalorder %s85, %s86
      %p97 = scmp.eq.s32.totalorder %s37, 0
      %p98 = por %p96, %p97
      %p99 = scmp.ne.s32.totalorder %s85, %s86
      %p100 = scmp.eq.s32.totalorder %s38, 1
      %p101 = por %p99, %p100
      %p103 = scmp.ne.s32.totalorder %s86, %s102
      %p104 = scmp.eq.s32.totalorder %s38, 0
      %p105 = por %p103, %p104
      %s107 = sadd.s32 %s106, 1
      %p110 = scmp.eq.s32.totalorder %s32, 1
      %p111 = scmp.ne.s32.totalorder %s106, %s108
      %p112 = scmp.eq.s32.totalorder %s32, 0
      %p113 = por %p111, %p112
      %p114 = scmp.ne.s32.totalorder %s106, %s108
      %p115 = scmp.eq.s32.totalorder %s37, 1
      %p116 = por %p114, %p115
      %p117 = scmp.ne.s32.totalorder %s108, %s109
      %p118 = scmp.eq.s32.totalorder %s37, 0
      %p119 = por %p117, %p118
      %p120 = scmp.ne.s32.totalorder %s108, %s109
      %p121 = scmp.eq.s32.totalorder %s38, 1
      %p122 = por %p120, %p121
      %p124 = scmp.ne.s32.totalorder %s109, %s123
      %p125 = scmp.eq.s32.totalorder %s38, 0
      %p126 = por %p124, %p125
      %s128 = sadd.s32 %s127, 1
      %p131 = scmp.eq.s32.totalorder %s32, 1
      %p132 = scmp.ne.s32.totalorder %s127, %s129
      %p133 = scmp.eq.s32.totalorder %s32, 0
      %p134 = por %p132, %p133
      %p135 = scmp.ne.s32.totalorder %s127, %s129
      %p136 = scmp.eq.s32.totalorder %s37, 1
      %p137 = por %p135, %p136
      %p138 = scmp.ne.s32.totalorder %s129, %s130
      %p139 = scmp.eq.s32.totalorder %s37, 0
      %p140 = por %p138, %p139
      %p141 = scmp.ne.s32.totalorder %s129, %s130
      %p142 = scmp.eq.s32.totalorder %s38, 1
      %p143 = por %p141, %p142
      %p145 = scmp.ne.s32.totalorder %s130, %s144
      %p146 = scmp.eq.s32.totalorder %s38, 0
      %p147 = por %p145, %p146
      %s149 = sadd.s32 %s148, 1
      %p152 = scmp.eq.s32.totalorder %s32, 1
      %p153 = scmp.ne.s32.totalorder %s148, %s150
      %p154 = scmp.eq.s32.totalorder %s32, 0
      %p155 = por %p153, %p154
      %p156 = scmp.ne.s32.totalorder %s148, %s150
      %p157 = scmp.eq.s32.totalorder %s37, 1
      %p158 = por %p156, %p157
      %p159 = scmp.ne.s32.totalorder %s150, %s151
      %p160 = scmp.eq.s32.totalorder %s37, 0
      %p161 = por %p159, %p160
      %p162 = scmp.ne.s32.totalorder %s150, %s151
      %p163 = scmp.eq.s32.totalorder %s38, 1
      %p164 = por %p162, %p163
      %p166 = scmp.ne.s32.totalorder %s151, %s165
      %p167 = scmp.eq.s32.totalorder %s38, 0
      %p168 = por %p166, %p167
      %s170 = sadd.s32 %s169, 1
      %p173 = scmp.eq.s32.totalorder %s32, 1
      %p174 = scmp.ne.s32.totalorder %s169, %s171
      %p175 = scmp.eq.s32.totalorder %s32, 0
      %p176 = por %p174, %p175
      %p177 = scmp.ne.s32.totalorder %s169, %s171
      %p178 = scmp.eq.s32.totalorder %s37, 1
      %p179 = por %p177, %p178
      %p180 = scmp.ne.s32.totalorder %s171, %s172
      %p181 = scmp.eq.s32.totalorder %s37, 0
      %p182 = por %p180, %p181
      %p183 = scmp.ne.s32.totalorder %s171, %s172
      %p184 = scmp.eq.s32.totalorder %s38, 1
      %p185 = por %p183, %p184
      %p187 = scmp.ne.s32.totalorder %s172, %s186
      %p188 = scmp.eq.s32.totalorder %s38, 0
      %p189 = por %p187, %p188
      %s191 = sadd.s32 %s190, 1
      %p194 = scmp.eq.s32.totalorder %s32, 1
      %p195 = scmp.ne.s32.totalorder %s190, %s192
      %p196 = scmp.eq.s32.totalorder %s32, 0
      %p197 = por %p195, %p196
      %p198 = scmp.ne.s32.totalorder %s190, %s192
      %p199 = scmp.eq.s32.totalorder %s37, 1
      %p200 = por %p198, %p199
      %p201 = scmp.ne.s32.totalorder %s192, %s193
      %p202 = scmp.eq.s32.totalorder %s37, 0
      %p203 = por %p201, %p202
      %p204 = scmp.ne.s32.totalorder %s192, %s193
      %p205 = scmp.eq.s32.totalorder %s38, 1
      %p206 = por %p204, %p205
      %p208 = scmp.ne.s32.totalorder %s193, %s207
      %p209 = scmp.eq.s32.totalorder %s38, 0
      %p210 = por %p208, %p209
      %s212 = sadd.s32 %s211, 1
      %p215 = scmp.eq.s32.totalorder %s32, 1
      %p216 = scmp.ne.s32.totalorder %s211, %s213
      %p217 = scmp.eq.s32.totalorder %s32, 0
      %p218 = por %p216, %p217
      %p219 = scmp.ne.s32.totalorder %s211, %s213
      %p220 = scmp.eq.s32.totalorder %s37, 1
      %p221 = por %p219, %p220
      %p222 = scmp.ne.s32.totalorder %s213, %s214
      %p223 = scmp.eq.s32.totalorder %s37, 0
      %p224 = por %p222, %p223
      %p225 = scmp.ne.s32.totalorder %s213, %s214
      %p226 = scmp.eq.s32.totalorder %s38, 1
      %p227 = por %p225, %p226
      %p229 = scmp.ne.s32.totalorder %s214, %s228
      %p230 = scmp.eq.s32.totalorder %s38, 0
      %p231 = por %p229, %p230
      %s233 = sadd.s32 %s232, 1
      %p236 = scmp.eq.s32.totalorder %s32, 1
      %p237 = scmp.ne.s32.totalorder %s232, %s234
      %p238 = scmp.eq.s32.totalorder %s32, 0
      %p239 = por %p237, %p238
      %p240 = scmp.ne.s32.totalorder %s232, %s234
      %p241 = scmp.eq.s32.totalorder %s37, 1
      %p242 = por %p240, %p241
      %p243 = scmp.ne.s32.totalorder %s234, %s235
      %p244 = scmp.eq.s32.totalorder %s37, 0
      %p245 = por %p243, %p244
      %p246 = scmp.ne.s32.totalorder %s234, %s235
      %p247 = scmp.eq.s32.totalorder %s38, 1
      %p248 = por %p246, %p247
      %p250 = scmp.ne.s32.totalorder %s235, %s249
      %p251 = scmp.eq.s32.totalorder %s38, 0
      %p252 = por %p250, %p251
      %s254 = sadd.s32 %s253, 1
      %p257 = scmp.eq.s32.totalorder %s32, 1
      %p258 = scmp.ne.s32.totalorder %s253, %s255
      %p259 = scmp.eq.s32.totalorder %s32, 0
      %p260 = por %p258, %p259
      %p261 = scmp.ne.s32.totalorder %s253, %s255
      %p262 = scmp.eq.s32.totalorder %s37, 1
      %p263 = por %p261, %p262
      %p264 = scmp.ne.s32.totalorder %s255, %s256
      %p265 = scmp.eq.s32.totalorder %s37, 0
      %p266 = por %p264, %p265
      %p267 = scmp.ne.s32.totalorder %s255, %s256
      %p268 = scmp.eq.s32.totalorder %s38, 1
      %p269 = por %p267, %p268
      %p271 = scmp.ne.s32.totalorder %s256, %s270
      %p272 = scmp.eq.s32.totalorder %s38, 0
      %p273 = por %p271, %p272
      %s275 = sadd.s32 %s274, 1
      %p278 = scmp.eq.s32.totalorder %s32, 1
      %p279 = scmp.ne.s32.totalorder %s274, %s276
      %p280 = scmp.eq.s32.totalorder %s32, 0
      %p281 = por %p279, %p280
      %p282 = scmp.ne.s32.totalorder %s274, %s276
      %p283 = scmp.eq.s32.totalorder %s37, 1
      %p284 = por %p282, %p283
      %p285 = scmp.ne.s32.totalorder %s276, %s277
      %p286 = scmp.eq.s32.totalorder %s37, 0
      %p287 = por %p285, %p286
      %p288 = scmp.ne.s32.totalorder %s276, %s277
      %p289 = scmp.eq.s32.totalorder %s38, 1
      %p290 = por %p288, %p289
      %p292 = scmp.ne.s32.totalorder %s277, %s291
      %p293 = scmp.eq.s32.totalorder %s38, 0
      %p294 = por %p292, %p293
      %s296 = sadd.s32 %s295, 1
      %p299 = scmp.eq.s32.totalorder %s32, 1
      %p300 = scmp.ne.s32.totalorder %s295, %s297
      %p301 = scmp.eq.s32.totalorder %s32, 0
      %p302 = por %p300, %p301
      %p303 = scmp.ne.s32.totalorder %s295, %s297
      %p304 = scmp.eq.s32.totalorder %s37, 1
      %p305 = por %p303, %p304
      %p306 = scmp.ne.s32.totalorder %s297, %s298
      %p307 = scmp.eq.s32.totalorder %s37, 0
      %p308 = por %p306, %p307
      %p309 = scmp.ne.s32.totalorder %s297, %s298
      %p310 = scmp.eq.s32.totalorder %s38, 1
      %p311 = por %p309, %p310
      %p313 = scmp.ne.s32.totalorder %s298, %s312
      %p314 = scmp.eq.s32.totalorder %s38, 0
      %p315 = por %p313, %p314
      %s316 = ssub.s32 %s39, %s51
      %s317 = ssub.s32 %s40, %s47
      %s318 = sor.u32 %s316, %s317
      %p319 = scmp.eq.s32.totalorder %s318, 0
      %s321 = sadd.s32 %s320, 1
      %s322 = scalar_select %p319, %s320, %s321
      %p325 = pneg %p319
      %p326 = scmp.eq.s32.totalorder %s32, 1
      %p327 = por %p325, %p326
      %p328 = scmp.ne.s32.totalorder %s320, %s323
      %p329 = scmp.eq.s32.totalorder %s32, 0
      %p330 = por %p328, %p329
      %p331 = scmp.ne.s32.totalorder %s320, %s323
      %p332 = scmp.eq.s32.totalorder %s37, 1
      %p333 = por %p331, %p332
      %p334 = scmp.ne.s32.totalorder %s323, %s324
      %p335 = scmp.eq.s32.totalorder %s37, 0
      %p336 = por %p334, %p335
      %p337 = scmp.ne.s32.totalorder %s323, %s324
      %p338 = scmp.eq.s32.totalorder %s38, 1
      %p339 = por %p337, %p338
      %p341 = scmp.ne.s32.totalorder %s324, %s340
      %p342 = scmp.eq.s32.totalorder %s38, 0
      %p343 = por %p341, %p342
      %s344 = ssub.s32 %s39, %s51
      %s345 = ssub.s32 %s40, %s47
      %s346 = sor.u32 %s344, %s345
      %p347 = scmp.eq.s32.totalorder %s346, 0
      %s349 = sadd.s32 %s348, 1
      %s350 = scalar_select %p347, %s348, %s349
      %p353 = pneg %p347
      %p354 = scmp.eq.s32.totalorder %s32, 1
      %p355 = por %p353, %p354
      %p356 = scmp.ne.s32.totalorder %s348, %s351
      %p357 = scmp.eq.s32.totalorder %s32, 0
      %p358 = por %p356, %p357
      %p359 = scmp.ne.s32.totalorder %s348, %s351
      %p360 = scmp.eq.s32.totalorder %s37, 1
      %p361 = por %p359, %p360
      %p362 = scmp.ne.s32.totalorder %s351, %s352
      %p363 = scmp.eq.s32.totalorder %s37, 0
      %p364 = por %p362, %p363
      %p365 = scmp.ne.s32.totalorder %s351, %s352
      %p366 = scmp.eq.s32.totalorder %s38, 1
      %p367 = por %p365, %p366
      %p369 = scmp.ne.s32.totalorder %s352, %s368
      %p370 = scmp.eq.s32.totalorder %s38, 0
      %p371 = por %p369, %p370
      %p372 = scmp.le.s32.totalorder 1, %s32
      %p373 = scmp.lt.s32.totalorder %s32, 3
      %p374 = pnand %p372, %p373
      %p375 = pneg %p374
      // Predicated region
      $region9: #{tpu_custom_call.1} parent=5 // pred_check
        _
      $region10: #{tpu_custom_call.1} parent=5 // pred_check_branch
        %377 = sbr.rel (%p374) target = $region12
      $region11: #{tpu_custom_call.1} parent=5 // pred_region
        %s378 = ssub.s32 %s32, 1
        // Predicated region
        $region13: #{tpu_custom_call.1} parent=11 // pred_check
          %p379 = pneg %p119
        $region14: #{tpu_custom_call.1} parent=11 // pred_check_branch
          %381 = sbr.rel (%p379) target = $region16
        $region15: #{tpu_custom_call.1} parent=11 // pred_region
          _
        $region16: #{tpu_custom_call.1} parent=11 // pred_fallthru
          _
        // Predicated region
        $region17: #{tpu_custom_call.1} parent=11 // pred_check
          %p382 = pneg %p140
        $region18: #{tpu_custom_call.1} parent=11 // pred_check_branch
          %384 = sbr.rel (%p382) target = $region20
        $region19: #{tpu_custom_call.1} parent=11 // pred_region
          _
        $region20: #{tpu_custom_call.1} parent=11 // pred_fallthru
          _
        // Predicated region
        $region21: #{tpu_custom_call.1} parent=11 // pred_check
          %p385 = pneg %p161
        $region22: #{tpu_custom_call.1} parent=11 // pred_check_branch
          %387 = sbr.rel (%p385) target = $region24
        $region23: #{tpu_custom_call.1} parent=11 // pred_region
          _
        $region24: #{tpu_custom_call.1} parent=11 // pred_fallthru
          _
        // Predicated region
        $region25: #{tpu_custom_call.1} parent=11 // pred_check
          %p388 = pneg %p182
        $region26: #{tpu_custom_call.1} parent=11 // pred_check_branch
          %390 = sbr.rel (%p388) target = $region28
        $region27: #{tpu_custom_call.1} parent=11 // pred_region
          _
        $region28: #{tpu_custom_call.1} parent=11 // pred_fallthru
          _
        // Predicated region
        $region29: #{tpu_custom_call.1} parent=11 // pred_check
          %p391 = pneg %p203
        $region30: #{tpu_custom_call.1} parent=11 // pred_check_branch
          %393 = sbr.rel (%p391) target = $region32
        $region31: #{tpu_custom_call.1} parent=11 // pred_region
          _
        $region32: #{tpu_custom_call.1} parent=11 // pred_fallthru
          _
        // Predicated region
        $region33: #{tpu_custom_call.1} parent=11 // pred_check
          %p394 = pneg %p224
        $region34: #{tpu_custom_call.1} parent=11 // pred_check_branch
          %396 = sbr.rel (%p394) target = $region36
        $region35: #{tpu_custom_call.1} parent=11 // pred_region
          _
        $region36: #{tpu_custom_call.1} parent=11 // pred_fallthru
          _
        // Predicated region
        $region37: #{tpu_custom_call.1} parent=11 // pred_check
          %p397 = pneg %p245
        $region38: #{tpu_custom_call.1} parent=11 // pred_check_branch
          %399 = sbr.rel (%p397) target = $region40
        $region39: #{tpu_custom_call.1} parent=11 // pred_region
          _
        $region40: #{tpu_custom_call.1} parent=11 // pred_fallthru
          _
        // Predicated region
        $region41: #{tpu_custom_call.1} parent=11 // pred_check
          %p400 = pneg %p266
        $region42: #{tpu_custom_call.1} parent=11 // pred_check_branch
          %402 = sbr.rel (%p400) target = $region44
        $region43: #{tpu_custom_call.1} parent=11 // pred_region
          _
        $region44: #{tpu_custom_call.1} parent=11 // pred_fallthru
          _
        // Predicated region
        $region45: #{tpu_custom_call.1} parent=11 // pred_check
          %p403 = pneg %p287
        $region46: #{tpu_custom_call.1} parent=11 // pred_check_branch
          %405 = sbr.rel (%p403) target = $region48
        $region47: #{tpu_custom_call.1} parent=11 // pred_region
          _
        $region48: #{tpu_custom_call.1} parent=11 // pred_fallthru
          _
        // Predicated region
        $region49: #{tpu_custom_call.1} parent=11 // pred_check
          %p406 = pneg %p308
        $region50: #{tpu_custom_call.1} parent=11 // pred_check_branch
          %408 = sbr.rel (%p406) target = $region52
        $region51: #{tpu_custom_call.1} parent=11 // pred_region
          _
        $region52: #{tpu_custom_call.1} parent=11 // pred_fallthru
          _
      $region12: #{tpu_custom_call.1} parent=5 // pred_fallthru
        _
      %p409 = scmp.lt.s32.totalorder %s32, 2
      // Predicated region
      $region53: #{tpu_custom_call.1} parent=5 // pred_check
        %p410 = pneg %p409
      $region54: #{tpu_custom_call.1} parent=5 // pred_check_branch
        %412 = sbr.rel (%p410) target = $region56
      $region55: #{tpu_custom_call.1} parent=5 // pred_region
        // Predicated region
        $region57: #{tpu_custom_call.1} parent=55 // pred_check
          %p413 = pneg %p66
        $region58: #{tpu_custom_call.1} parent=55 // pred_check_branch
          %415 = sbr.rel (%p413) target = $region60
        $region59: #{tpu_custom_call.1} parent=55 // pred_region
          %s416 = sand.u32 %s56, 1
          %s417 = scalar_lea.sflag [#allocation5], %s416
          %s418 = sand.u32 %s56, 1
          %s419 = smul.addr %s418, 8
          %s420 = scalar_lea.vmem [#allocation4], %s419
          %s422 = ssub.s32 128, 128
          %423 = vsyncadd %s417, %s422
          %s424 = sadd.s32 %s40, %s39
          %s425 = smul.addr %s424, 128
          %s426 = scalar_lea.hbm %s0, %s425
          %s428 = sshll.u32 %s420, 4
          %s429 = int_to_ptr.vmem [resolvable:$true] %s428
          %431 = dma.hbm_to_vmem [thread:$0]  %s426, 128, %s429, %s417
        $region60: #{tpu_custom_call.1} parent=55 // pred_fallthru
          _
        // Predicated region
        $region61: #{tpu_custom_call.1} parent=55 // pred_check
          %p432 = pneg %p92
        $region62: #{tpu_custom_call.1} parent=55 // pred_check_branch
          %434 = sbr.rel (%p432) target = $region64
        $region63: #{tpu_custom_call.1} parent=55 // pred_region
          %s435 = sand.u32 %s82, 1
          %s436 = scalar_lea.sflag [#allocation8], %s435
          %s437 = sand.u32 %s82, 1
          %s438 = smul.addr %s437, 8
          %s439 = scalar_lea.vmem [#allocation7], %s438
          %s441 = ssub.s32 128, 128
          %442 = vsyncadd %s436, %s441
          %s443 = smul.addr %s39, 128
          %s444 = scalar_lea.hbm %s1, %s443
          %s446 = sshll.u32 %s439, 4
          %s447 = int_to_ptr.vmem [resolvable:$true] %s446
          %449 = dma.hbm_to_vmem [thread:$0]  %s444, 128, %s447, %s436
        $region64: #{tpu_custom_call.1} parent=55 // pred_fallthru
          _
      $region56: #{tpu_custom_call.1} parent=5 // pred_fallthru
        _
      %p450 = scmp.le.s32.totalorder 1, %s32
      %p451 = scmp.lt.s32.totalorder %s32, 3
      %p452 = pnand %p450, %p451
      %p453 = pneg %p452
      // Predicated region
      $region65: #{tpu_custom_call.1} parent=5 // pred_check
        _
      $region66: #{tpu_custom_call.1} parent=5 // pred_check_branch
        %455 = sbr.rel (%p452) target = $region68
      $region67: #{tpu_custom_call.1} parent=5 // pred_region
        %s456 = ssub.s32 %s32, 1
        %s457 = sand.u32 %s59, 1
        %s458 = scalar_lea.sflag [#allocation5], %s457
        %s459 = sand.u32 %s59, 1
        %s460 = smul.addr %s459, 8
        %s461 = scalar_lea.vmem [#allocation4], %s460
        // Predicated region
        $region69: #{tpu_custom_call.1} parent=67 // pred_check
          %p462 = pneg %p72
        $region70: #{tpu_custom_call.1} parent=67 // pred_check_branch
          %464 = sbr.rel (%p462) target = $region72
        $region71: #{tpu_custom_call.1} parent=67 // pred_region
          %465 = dma.done %s458, 128
        $region72: #{tpu_custom_call.1} parent=67 // pred_fallthru
          _
        %s466 = sand.u32 %s85, 1
        %s467 = scalar_lea.sflag [#allocation8], %s466
        %s468 = sand.u32 %s85, 1
        %s469 = smul.addr %s468, 8
        %s470 = scalar_lea.vmem [#allocation7], %s469
        // Predicated region
        $region73: #{tpu_custom_call.1} parent=67 // pred_check
          %p471 = pneg %p98
        $region74: #{tpu_custom_call.1} parent=67 // pred_check_branch
          %473 = sbr.rel (%p471) target = $region76
        $region75: #{tpu_custom_call.1} parent=67 // pred_region
          %474 = dma.done %s467, 128
        $region76: #{tpu_custom_call.1} parent=67 // pred_fallthru
          _
        %s475 = sand.u32 %s59, 1
        %s476 = scalar_lea.sflag [#allocation5], %s475
        %s477 = sand.u32 %s59, 1
        %s478 = smul.addr %s477, 8
        %s479 = scalar_lea.vmem [#allocation4], %s478
        %p480 = pneg %p72
        %p481 = pneg %p69
        %s482 = sand.u32 %s85, 1
        %s483 = scalar_lea.sflag [#allocation8], %s482
        %s484 = sand.u32 %s85, 1
        %s485 = smul.addr %s484, 8
        %s486 = scalar_lea.vmem [#allocation7], %s485
        %p487 = pneg %p98
        %p488 = pneg %p95
        %p489 = pneg %p119
        %p490 = pneg %p116
        %p491 = pneg %p140
        %p492 = pneg %p137
        %p493 = pneg %p161
        %p494 = pneg %p158
        %p495 = pneg %p182
        %p496 = pneg %p179
        %p497 = pneg %p203
        %p498 = pneg %p200
        %p499 = pneg %p224
        %p500 = pneg %p221
        %p501 = pneg %p245
        %p502 = pneg %p242
        %p503 = pneg %p266
        %p504 = pneg %p263
        %p505 = pneg %p287
        %p506 = pneg %p284
        %p507 = pneg %p308
        %p508 = pneg %p305
        %p509 = pneg %p336
        %p510 = pneg %p333
        %s511 = sand.u32 %s323, 1
        %s512 = scalar_lea.sflag [#allocation6], %s511
        %s513 = sand.u32 %s323, 1
        %s514 = smul.addr %s513, 8
        %s515 = scalar_lea.vmem [#allocation9], %s514
        %p516 = pneg %p364
        %p517 = pneg %p361
        %s518 = sand.u32 %s351, 1
        %s519 = scalar_lea.sflag [#allocation11], %s518
        %s520 = sand.u32 %s351, 1
        %s521 = smul.addr %s520, 32
        %s522 = scalar_lea.vmem [#allocation10], %s521
        %p523 = scmp.eq.s32.totalorder %s42, 0
        // Predicated region
        $region77: #{tpu_custom_call.1} parent=67 // pred_check
          %p524 = pneg %p523
        $region78: #{tpu_custom_call.1} parent=67 // pred_check_branch
          %526 = sbr.rel (%p524) target = $region80
        $region79: #{tpu_custom_call.1} parent=67 // pred_region
          %v527 = vld [vmem:[%s470] sm:$0xff]
          %v528 = vld [vmem:[%s3] sm:$0xff]
          %v529 = vld [vmem:[%s3 + $0x8] sm:$0xff]
          %v530 = vld [vmem:[%s3 + $0x10] sm:$0xff]
          %v531 = vld [vmem:[%s3 + $0x18] sm:$0xff]
          %vm532 = vcmask 261120
          %v534 = vsel %vm532, %v527, 0
          %536 = vmatprep.subr.mxu0 0.0
          %537 = vmatpush1.msra.mxu0 0.0
          %538 = vmatprep.subr.mxu0 0.0
          %539 = vmatpush1.msra.mxu0 0.0
          %540 = vmatprep.subr.mxu0 0.0
          %541 = vmatpush1.msra.mxu0 0.0
          %542 = vmatprep.subr.mxu0 0.0
          %543 = vmatpush1.msra.mxu0 0.0
          %544 = vmatprep.subr.mxu0 0.0
          %545 = vmatpush1.msra.mxu0 0.0
          %546 = vmatprep.subr.mxu0 0.0
          %547 = vmatpush1.msra.mxu0 0.0
          %548 = vmatprep.subr.mxu0 0.0
          %549 = vmatpush1.msra.mxu0 0.0
          %550 = vmatprep.subr.mxu0 0.0
          %551 = vmatpush1.msra.mxu0 0.0
          %552 = vmatprep.subr.mxu0 0.0
          %553 = vmatpush1.msra.mxu0 0.0
          %554 = vmatprep.subr.mxu0 0.0
          %555 = vmatpush1.msra.mxu0 0.0
          %556 = vmatprep.subr.mxu0 0.0
          %557 = vmatpush1.msra.mxu0 0.0
          %558 = vmatprep.subr.mxu0 0.0
          %559 = vmatpush1.msra.mxu0 0.0
          %560 = vmatprep.subr.mxu0 0.0
          %561 = vmatpush1.msra.mxu0 %v531
          %562 = vmatprep.subr.mxu0 0.0
          %563 = vmatpush1.msra.mxu0 %v530
          %564 = vmatprep.subr.mxu0 0.0
          %565 = vmatpush1.msra.mxu0 %v529
          %566 = vmatprep.subr.mxu0 0.0
          %567 = vmatpush1.msra.mxu0 %v528
          %568 = vmatprep.subr.mxu0 0.0
          %569 = vmatpush2.msra.mxu0 0.0
          %570 = vmatprep.subr.mxu0 0.0
          %571 = vmatpush2.msra.mxu0 0.0
          %572 = vmatprep.subr.mxu0 0.0
          %573 = vmatpush2.msra.mxu0 0.0
          %574 = vmatprep.subr.mxu0 0.0
          %575 = vmatpush2.msra.mxu0 0.0
          %576 = vmatprep.subr.mxu0 0.0
          %577 = vmatpush2.msra.mxu0 0.0
          %578 = vmatprep.subr.mxu0 0.0
          %579 = vmatpush2.msra.mxu0 0.0
          %580 = vmatprep.subr.mxu0 0.0
          %581 = vmatpush2.msra.mxu0 0.0
          %582 = vmatprep.subr.mxu0 0.0
          %583 = vmatpush2.msra.mxu0 0.0
          %584 = vmatprep.subr.mxu0 0.0
          %585 = vmatpush2.msra.mxu0 0.0
          %586 = vmatprep.subr.mxu0 0.0
          %587 = vmatpush2.msra.mxu0 0.0
          %588 = vmatprep.subr.mxu0 0.0
          %589 = vmatpush2.msra.mxu0 0.0
          %590 = vmatprep.subr.mxu0 0.0
          %591 = vmatpush2.msra.mxu0 0.0
          %592 = vmatprep.subr.mxu0 0.0
          %593 = vmatpush2.msra.mxu0 0.0
          %594 = vmatprep.subr.mxu0 0.0
          %595 = vmatpush2.msra.mxu0 0.0
          %596 = vmatprep.subr.mxu0 0.0
          %597 = vmatpush2.msra.mxu0 0.0
          %598 = vmatprep.subr.mxu0 0.0
          %599 = vmatpush2.msra.mxu0 0.0
          %600 = vmatprep.mubr.f32.mxu0 0.0
          %601 = vmatmul.mubr.f32.gmra.mxu0 %v534
          %v602 = vpop.f32.mrf.mxu0
          %v603 = vadd.f32 0.0, %v602
          %v604 = vpop.f32.mrf.mxu0
          %605 = vdwg.mxu0
          %607 = vrot.lane.b32.xlu0 %v603, 120
          %v608 = vpop.permute.xlu0 %607
          %610 = vrot.lane.b32.xlu0 %v603, 112
          %v611 = vpop.permute.xlu0 %610
          %613 = vrot.lane.b32.xlu0 %v603, 104
          %v614 = vpop.permute.xlu0 %613
          %v616 = vcombine.low %v603, %v611
          %v617 = vcombine.high %v603, %v611
          %v619 = vunpack.c.l.s4 1983009808
          %v620 = vunpack.c.0.s8 %v619
          %v621 = vlaneseq
          %v622 = vshrl.u32 %v621, 7
          %v623 = vsub.s32 %v620, %v622
          %v624 = vrot.slane %v616, %v623
          %v626 = vunpack.c.l.s4 1983009808
          %v627 = vunpack.c.0.s8 %v626
          %v628 = vlaneseq
          %v629 = vshrl.u32 %v628, 7
          %v630 = vsub.s32 %v627, %v629
          %v631 = vrot.slane %v617, %v630
          %v632 = vcombine.low %v608, %v614
          %v633 = vcombine.high %v608, %v614
          %v635 = vunpack.c.l.s4 1983009808
          %v636 = vunpack.c.0.s8 %v635
          %v637 = vlaneseq
          %v638 = vshrl.u32 %v637, 7
          %v639 = vsub.s32 %v636, %v638
          %v640 = vrot.slane %v632, %v639
          %v642 = vunpack.c.l.s4 1983009808
          %v643 = vunpack.c.0.s8 %v642
          %v644 = vlaneseq
          %v645 = vshrl.u32 %v644, 7
          %v646 = vsub.s32 %v643, %v645
          %v647 = vrot.slane %v633, %v646
          %v648 = vcombine.low %v624, %v640
          %v649 = vcombine.high %v624, %v640
          %v651 = vunpack.c.l.s4 1934713408
          %v652 = vunpack.c.0.s8 %v651
          %v653 = vlaneseq
          %v654 = vshrl.u32 %v653, 7
          %v655 = vsub.s32 %v652, %v654
          %v656 = vrot.slane %v648, %v655
          %v658 = vunpack.c.l.s4 1934713408
          %v659 = vunpack.c.0.s8 %v658
          %v660 = vlaneseq
          %v661 = vshrl.u32 %v660, 7
          %v662 = vsub.s32 %v659, %v661
          %v663 = vrot.slane %v649, %v662
          %v664 = vcombine.low %v631, %v647
          %v665 = vcombine.high %v631, %v647
          %v667 = vunpack.c.l.s4 1934713408
          %v668 = vunpack.c.0.s8 %v667
          %v669 = vlaneseq
          %v670 = vshrl.u32 %v669, 7
          %v671 = vsub.s32 %v668, %v670
          %v672 = vrot.slane %v664, %v671
          %v674 = vunpack.c.l.s4 1934713408
          %v675 = vunpack.c.0.s8 %v674
          %v676 = vlaneseq
          %v677 = vshrl.u32 %v676, 7
          %v678 = vsub.s32 %v675, %v677
          %v679 = vrot.slane %v665, %v678
          %v680 = vcombine.high %v656, 0.0
          %v681 = vcombine.high %v663, 0.0
          %v682 = vcombine.high %v672, 0.0
          %v683 = vcombine.high %v679, 0.0
          %v684 = vcombine.low %v656, %v663
          %v686 = vunpack.c.l.s4 1983009808
          %v687 = vunpack.c.0.s8 %v686
          %v688 = vlaneseq
          %v689 = vshrl.u32 %v688, 7
          %v690 = vsub.s32 %v687, %v689
          %v691 = vrot.slane %v684, %v690
          %v692 = vcombine.low %v680, %v681
          %v694 = vunpack.c.l.s4 1983009808
          %v695 = vunpack.c.0.s8 %v694
          %v696 = vlaneseq
          %v697 = vshrl.u32 %v696, 7
          %v698 = vsub.s32 %v695, %v697
          %v699 = vrot.slane %v692, %v698
          %v700 = vcombine.low %v672, %v679
          %v702 = vunpack.c.l.s4 1983009808
          %v703 = vunpack.c.0.s8 %v702
          %v704 = vlaneseq
          %v705 = vshrl.u32 %v704, 7
          %v706 = vsub.s32 %v703, %v705
          %v707 = vrot.slane %v700, %v706
          %v708 = vcombine.low %v682, %v683
          %v710 = vunpack.c.l.s4 1983009808
          %v711 = vunpack.c.0.s8 %v710
          %v712 = vlaneseq
          %v713 = vshrl.u32 %v712, 7
          %v714 = vsub.s32 %v711, %v713
          %v715 = vrot.slane %v708, %v714
          %v716 = vcombine.low %v691, %v699
          %v717 = vcombine.high %v691, %v699
          %v719 = vunpack.c.l.s4 1934713408
          %v720 = vunpack.c.0.s8 %v719
          %v721 = vlaneseq
          %v722 = vshrl.u32 %v721, 7
          %v723 = vsub.s32 %v720, %v722
          %v724 = vrot.slane %v716, %v723
          %v726 = vunpack.c.l.s4 1934713408
          %v727 = vunpack.c.0.s8 %v726
          %v728 = vlaneseq
          %v729 = vshrl.u32 %v728, 7
          %v730 = vsub.s32 %v727, %v729
          %v731 = vrot.slane %v717, %v730
          %v732 = vcombine.low %v707, %v715
          %v733 = vcombine.high %v707, %v715
          %v735 = vunpack.c.l.s4 1934713408
          %v736 = vunpack.c.0.s8 %v735
          %v737 = vlaneseq
          %v738 = vshrl.u32 %v737, 7
          %v739 = vsub.s32 %v736, %v738
          %v740 = vrot.slane %v732, %v739
          %v742 = vunpack.c.l.s4 1934713408
          %v743 = vunpack.c.0.s8 %v742
          %v744 = vlaneseq
          %v745 = vshrl.u32 %v744, 7
          %v746 = vsub.s32 %v743, %v745
          %v747 = vrot.slane %v733, %v746
          %v748 = vcombine.low %v724, %v740
          %v749 = vcombine.high %v724, %v740
          %v750 = vcombine.low %v731, %v747
          %v751 = vcombine.high %v731, %v747
          %vm752 = vcmask 64512
          %753 = vst.msk [vmem:[#allocation2] sm:$0xff] %vm752, %v748
          %754 = vst.msk [vmem:[#allocation2 + $0x8] sm:$0xff] %vm752, %v749
          %755 = vst.msk [vmem:[#allocation2 + $0x10] sm:$0xff] %vm752, %v750
          %756 = vst.msk [vmem:[#allocation2 + $0x18] sm:$0xff] %vm752, %v751
          %757 = vrot.lane.b32.xlu0 %v603, 96
          %v758 = vpop.permute.xlu0 %757
          %759 = vrot.lane.b32.xlu0 %v608, 96
          %v760 = vpop.permute.xlu0 %759
          %761 = vrot.lane.b32.xlu0 %v611, 96
          %v762 = vpop.permute.xlu0 %761
          %763 = vrot.lane.b32.xlu0 %v614, 96
          %v764 = vpop.permute.xlu0 %763
          %v769 = vcombine.low %v758, %v762
          %v770 = vcombine.high %v758, %v762
          %v772 = vunpack.c.l.s4 1983009808
          %v773 = vunpack.c.0.s8 %v772
          %v774 = vlaneseq
          %v775 = vshrl.u32 %v774, 7
          %v776 = vsub.s32 %v773, %v775
          %v777 = vrot.slane %v769, %v776
          %v779 = vunpack.c.l.s4 1983009808
          %v780 = vunpack.c.0.s8 %v779
          %v781 = vlaneseq
          %v782 = vshrl.u32 %v781, 7
          %v783 = vsub.s32 %v780, %v782
          %v784 = vrot.slane %v770, %v783
          %v785 = vcombine.low %v760, %v764
          %v786 = vcombine.high %v760, %v764
          %v788 = vunpack.c.l.s4 1983009808
          %v789 = vunpack.c.0.s8 %v788
          %v790 = vlaneseq
          %v791 = vshrl.u32 %v790, 7
          %v792 = vsub.s32 %v789, %v791
          %v793 = vrot.slane %v785, %v792
          %v795 = vunpack.c.l.s4 1983009808
          %v796 = vunpack.c.0.s8 %v795
          %v797 = vlaneseq
          %v798 = vshrl.u32 %v797, 7
          %v799 = vsub.s32 %v796, %v798
          %v800 = vrot.slane %v786, %v799
          %v801 = vcombine.low %v777, %v793
          %v802 = vcombine.high %v777, %v793
          %v804 = vunpack.c.l.s4 1934713408
          %v805 = vunpack.c.0.s8 %v804
          %v806 = vlaneseq
          %v807 = vshrl.u32 %v806, 7
          %v808 = vsub.s32 %v805, %v807
          %v809 = vrot.slane %v801, %v808
          %v811 = vunpack.c.l.s4 1934713408
          %v812 = vunpack.c.0.s8 %v811
          %v813 = vlaneseq
          %v814 = vshrl.u32 %v813, 7
          %v815 = vsub.s32 %v812, %v814
          %v816 = vrot.slane %v802, %v815
          %v817 = vcombine.low %v784, %v800
          %v818 = vcombine.high %v784, %v800
          %v820 = vunpack.c.l.s4 1934713408
          %v821 = vunpack.c.0.s8 %v820
          %v822 = vlaneseq
          %v823 = vshrl.u32 %v822, 7
          %v824 = vsub.s32 %v821, %v823
          %v825 = vrot.slane %v817, %v824
          %v827 = vunpack.c.l.s4 1934713408
          %v828 = vunpack.c.0.s8 %v827
          %v829 = vlaneseq
          %v830 = vshrl.u32 %v829, 7
          %v831 = vsub.s32 %v828, %v830
          %v832 = vrot.slane %v818, %v831
          %v833 = vcombine.high %v809, 0.0
          %v834 = vcombine.high %v816, 0.0
          %v835 = vcombine.high %v825, 0.0
          %v836 = vcombine.high %v832, 0.0
          %v837 = vcombine.low %v809, %v816
          %v839 = vunpack.c.l.s4 1983009808
          %v840 = vunpack.c.0.s8 %v839
          %v841 = vlaneseq
          %v842 = vshrl.u32 %v841, 7
          %v843 = vsub.s32 %v840, %v842
          %v844 = vrot.slane %v837, %v843
          %v845 = vcombine.low %v833, %v834
          %v847 = vunpack.c.l.s4 1983009808
          %v848 = vunpack.c.0.s8 %v847
          %v849 = vlaneseq
          %v850 = vshrl.u32 %v849, 7
          %v851 = vsub.s32 %v848, %v850
          %v852 = vrot.slane %v845, %v851
          %v853 = vcombine.low %v825, %v832
          %v855 = vunpack.c.l.s4 1983009808
          %v856 = vunpack.c.0.s8 %v855
          %v857 = vlaneseq
          %v858 = vshrl.u32 %v857, 7
          %v859 = vsub.s32 %v856, %v858
          %v860 = vrot.slane %v853, %v859
          %v861 = vcombine.low %v835, %v836
          %v863 = vunpack.c.l.s4 1983009808
          %v864 = vunpack.c.0.s8 %v863
          %v865 = vlaneseq
          %v866 = vshrl.u32 %v865, 7
          %v867 = vsub.s32 %v864, %v866
          %v868 = vrot.slane %v861, %v867
          %v869 = vcombine.low %v844, %v852
          %v870 = vcombine.high %v844, %v852
          %v872 = vunpack.c.l.s4 1934713408
          %v873 = vunpack.c.0.s8 %v872
          %v874 = vlaneseq
          %v875 = vshrl.u32 %v874, 7
          %v876 = vsub.s32 %v873, %v875
          %v877 = vrot.slane %v869, %v876
          %v879 = vunpack.c.l.s4 1934713408
          %v880 = vunpack.c.0.s8 %v879
          %v881 = vlaneseq
          %v882 = vshrl.u32 %v881, 7
          %v883 = vsub.s32 %v880, %v882
          %v884 = vrot.slane %v870, %v883
          %v885 = vcombine.low %v860, %v868
          %v886 = vcombine.high %v860, %v868
          %v888 = vunpack.c.l.s4 1934713408
          %v889 = vunpack.c.0.s8 %v888
          %v890 = vlaneseq
          %v891 = vshrl.u32 %v890, 7
          %v892 = vsub.s32 %v889, %v891
          %v893 = vrot.slane %v885, %v892
          %v895 = vunpack.c.l.s4 1934713408
          %v896 = vunpack.c.0.s8 %v895
          %v897 = vlaneseq
          %v898 = vshrl.u32 %v897, 7
          %v899 = vsub.s32 %v896, %v898
          %v900 = vrot.slane %v886, %v899
          %v901 = vcombine.low %v877, %v893
          %v902 = vcombine.high %v877, %v893
          %v903 = vcombine.low %v884, %v900
          %v904 = vcombine.high %v884, %v900
          %905 = vst.msk [vmem:[#allocation3] sm:$0xff] %vm752, %v901
          %906 = vst.msk [vmem:[#allocation3 + $0x8] sm:$0xff] %vm752, %v902
          %907 = vst.msk [vmem:[#allocation3 + $0x10] sm:$0xff] %vm752, %v903
          %908 = vst.msk [vmem:[#allocation3 + $0x18] sm:$0xff] %vm752, %v904
        $region80: #{tpu_custom_call.1} parent=67 // pred_fallthru
          _
        %v909 = vld [vmem:[%s461] sm:$0xff]
        %v910 = vld [vmem:[%s2] sm:$0xff]
        %v911 = vld [vmem:[%s2 + $0x8] sm:$0xff]
        %v912 = vld [vmem:[%s2 + $0x10] sm:$0xff]
        %v913 = vld [vmem:[%s2 + $0x18] sm:$0xff]
        %vm914 = vcmask 261120
        %v916 = vsel %vm914, %v909, 0
        %918 = vmatprep.subr.mxu0 0.0
        %919 = vmatpush1.msra.mxu0 0.0
        %920 = vmatprep.subr.mxu0 0.0
        %921 = vmatpush1.msra.mxu0 0.0
        %922 = vmatprep.subr.mxu0 0.0
        %923 = vmatpush1.msra.mxu0 0.0
        %924 = vmatprep.subr.mxu0 0.0
        %925 = vmatpush1.msra.mxu0 0.0
        %926 = vmatprep.subr.mxu0 0.0
        %927 = vmatpush1.msra.mxu0 0.0
        %928 = vmatprep.subr.mxu0 0.0
        %929 = vmatpush1.msra.mxu0 0.0
        %930 = vmatprep.subr.mxu0 0.0
        %931 = vmatpush1.msra.mxu0 0.0
        %932 = vmatprep.subr.mxu0 0.0
        %933 = vmatpush1.msra.mxu0 0.0
        %934 = vmatprep.subr.mxu0 0.0
        %935 = vmatpush1.msra.mxu0 0.0
        %936 = vmatprep.subr.mxu0 0.0
        %937 = vmatpush1.msra.mxu0 0.0
        %938 = vmatprep.subr.mxu0 0.0
        %939 = vmatpush1.msra.mxu0 0.0
        %940 = vmatprep.subr.mxu0 0.0
        %941 = vmatpush1.msra.mxu0 0.0
        %942 = vmatprep.subr.mxu0 0.0
        %943 = vmatpush1.msra.mxu0 %v913
        %944 = vmatprep.subr.mxu0 0.0
        %945 = vmatpush1.msra.mxu0 %v912
        %946 = vmatprep.subr.mxu0 0.0
        %947 = vmatpush1.msra.mxu0 %v911
        %948 = vmatprep.subr.mxu0 0.0
        %949 = vmatpush1.msra.mxu0 %v910
        %950 = vmatprep.subr.mxu0 0.0
        %951 = vmatpush2.msra.mxu0 0.0
        %952 = vmatprep.subr.mxu0 0.0
        %953 = vmatpush2.msra.mxu0 0.0
        %954 = vmatprep.subr.mxu0 0.0
        %955 = vmatpush2.msra.mxu0 0.0
        %956 = vmatprep.subr.mxu0 0.0
        %957 = vmatpush2.msra.mxu0 0.0
        %958 = vmatprep.subr.mxu0 0.0
        %959 = vmatpush2.msra.mxu0 0.0
        %960 = vmatprep.subr.mxu0 0.0
        %961 = vmatpush2.msra.mxu0 0.0
        %962 = vmatprep.subr.mxu0 0.0
        %963 = vmatpush2.msra.mxu0 0.0
        %964 = vmatprep.subr.mxu0 0.0
        %965 = vmatpush2.msra.mxu0 0.0
        %966 = vmatprep.subr.mxu0 0.0
        %967 = vmatpush2.msra.mxu0 0.0
        %968 = vmatprep.subr.mxu0 0.0
        %969 = vmatpush2.msra.mxu0 0.0
        %970 = vmatprep.subr.mxu0 0.0
        %971 = vmatpush2.msra.mxu0 0.0
        %972 = vmatprep.subr.mxu0 0.0
        %973 = vmatpush2.msra.mxu0 0.0
        %974 = vmatprep.subr.mxu0 0.0
        %975 = vmatpush2.msra.mxu0 0.0
        %976 = vmatprep.subr.mxu0 0.0
        %977 = vmatpush2.msra.mxu0 0.0
        %978 = vmatprep.subr.mxu0 0.0
        %979 = vmatpush2.msra.mxu0 0.0
        %980 = vmatprep.subr.mxu0 0.0
        %981 = vmatpush2.msra.mxu0 0.0
        %982 = vmatprep.mubr.f32.mxu0 0.0
        %983 = vmatmul.mubr.f32.gmra.mxu0 %v916
        %v984 = vpop.f32.mrf.mxu0
        %v985 = vadd.f32 0.0, %v984
        %v986 = vpop.f32.mrf.mxu0
        %987 = vdwg.mxu0
        %989 = vrot.lane.b32.xlu0 %v985, 120
        %v990 = vpop.permute.xlu0 %989
        %992 = vrot.lane.b32.xlu0 %v985, 112
        %v993 = vpop.permute.xlu0 %992
        %995 = vrot.lane.b32.xlu0 %v985, 104
        %v996 = vpop.permute.xlu0 %995
        %v998 = vcombine.low %v985, %v993
        %v999 = vcombine.high %v985, %v993
        %v1001 = vunpack.c.l.s4 1983009808
        %v1002 = vunpack.c.0.s8 %v1001
        %v1003 = vlaneseq
        %v1004 = vshrl.u32 %v1003, 7
        %v1005 = vsub.s32 %v1002, %v1004
        %v1006 = vrot.slane %v998, %v1005
        %v1008 = vunpack.c.l.s4 1983009808
        %v1009 = vunpack.c.0.s8 %v1008
        %v1010 = vlaneseq
        %v1011 = vshrl.u32 %v1010, 7
        %v1012 = vsub.s32 %v1009, %v1011
        %v1013 = vrot.slane %v999, %v1012
        %v1014 = vcombine.low %v990, %v996
        %v1015 = vcombine.high %v990, %v996
        %v1017 = vunpack.c.l.s4 1983009808
        %v1018 = vunpack.c.0.s8 %v1017
        %v1019 = vlaneseq
        %v1020 = vshrl.u32 %v1019, 7
        %v1021 = vsub.s32 %v1018, %v1020
        %v1022 = vrot.slane %v1014, %v1021
        %v1024 = vunpack.c.l.s4 1983009808
        %v1025 = vunpack.c.0.s8 %v1024
        %v1026 = vlaneseq
        %v1027 = vshrl.u32 %v1026, 7
        %v1028 = vsub.s32 %v1025, %v1027
        %v1029 = vrot.slane %v1015, %v1028
        %v1030 = vcombine.low %v1006, %v1022
        %v1031 = vcombine.high %v1006, %v1022
        %v1033 = vunpack.c.l.s4 1934713408
        %v1034 = vunpack.c.0.s8 %v1033
        %v1035 = vlaneseq
        %v1036 = vshrl.u32 %v1035, 7
        %v1037 = vsub.s32 %v1034, %v1036
        %v1038 = vrot.slane %v1030, %v1037
        %v1040 = vunpack.c.l.s4 1934713408
        %v1041 = vunpack.c.0.s8 %v1040
        %v1042 = vlaneseq
        %v1043 = vshrl.u32 %v1042, 7
        %v1044 = vsub.s32 %v1041, %v1043
        %v1045 = vrot.slane %v1031, %v1044
        %v1046 = vcombine.low %v1013, %v1029
        %v1047 = vcombine.high %v1013, %v1029
        %v1049 = vunpack.c.l.s4 1934713408
        %v1050 = vunpack.c.0.s8 %v1049
        %v1051 = vlaneseq
        %v1052 = vshrl.u32 %v1051, 7
        %v1053 = vsub.s32 %v1050, %v1052
        %v1054 = vrot.slane %v1046, %v1053
        %v1056 = vunpack.c.l.s4 1934713408
        %v1057 = vunpack.c.0.s8 %v1056
        %v1058 = vlaneseq
        %v1059 = vshrl.u32 %v1058, 7
        %v1060 = vsub.s32 %v1057, %v1059
        %v1061 = vrot.slane %v1047, %v1060
        %v1062 = vcombine.high %v1038, 0.0
        %v1063 = vcombine.high %v1045, 0.0
        %v1064 = vcombine.high %v1054, 0.0
        %v1065 = vcombine.high %v1061, 0.0
        %v1066 = vcombine.low %v1038, %v1045
        %v1068 = vunpack.c.l.s4 1983009808
        %v1069 = vunpack.c.0.s8 %v1068
        %v1070 = vlaneseq
        %v1071 = vshrl.u32 %v1070, 7
        %v1072 = vsub.s32 %v1069, %v1071
        %v1073 = vrot.slane %v1066, %v1072
        %v1074 = vcombine.low %v1062, %v1063
        %v1076 = vunpack.c.l.s4 1983009808
        %v1077 = vunpack.c.0.s8 %v1076
        %v1078 = vlaneseq
        %v1079 = vshrl.u32 %v1078, 7
        %v1080 = vsub.s32 %v1077, %v1079
        %v1081 = vrot.slane %v1074, %v1080
        %v1082 = vcombine.low %v1054, %v1061
        %v1084 = vunpack.c.l.s4 1983009808
        %v1085 = vunpack.c.0.s8 %v1084
        %v1086 = vlaneseq
        %v1087 = vshrl.u32 %v1086, 7
        %v1088 = vsub.s32 %v1085, %v1087
        %v1089 = vrot.slane %v1082, %v1088
        %v1090 = vcombine.low %v1064, %v1065
        %v1092 = vunpack.c.l.s4 1983009808
        %v1093 = vunpack.c.0.s8 %v1092
        %v1094 = vlaneseq
        %v1095 = vshrl.u32 %v1094, 7
        %v1096 = vsub.s32 %v1093, %v1095
        %v1097 = vrot.slane %v1090, %v1096
        %v1098 = vcombine.low %v1073, %v1081
        %v1099 = vcombine.high %v1073, %v1081
        %v1101 = vunpack.c.l.s4 1934713408
        %v1102 = vunpack.c.0.s8 %v1101
        %v1103 = vlaneseq
        %v1104 = vshrl.u32 %v1103, 7
        %v1105 = vsub.s32 %v1102, %v1104
        %v1106 = vrot.slane %v1098, %v1105
        %v1108 = vunpack.c.l.s4 1934713408
        %v1109 = vunpack.c.0.s8 %v1108
        %v1110 = vlaneseq
        %v1111 = vshrl.u32 %v1110, 7
        %v1112 = vsub.s32 %v1109, %v1111
        %v1113 = vrot.slane %v1099, %v1112
        %v1114 = vcombine.low %v1089, %v1097
        %v1115 = vcombine.high %v1089, %v1097
        %v1117 = vunpack.c.l.s4 1934713408
        %v1118 = vunpack.c.0.s8 %v1117
        %v1119 = vlaneseq
        %v1120 = vshrl.u32 %v1119, 7
        %v1121 = vsub.s32 %v1118, %v1120
        %v1122 = vrot.slane %v1114, %v1121
        %v1124 = vunpack.c.l.s4 1934713408
        %v1125 = vunpack.c.0.s8 %v1124
        %v1126 = vlaneseq
        %v1127 = vshrl.u32 %v1126, 7
        %v1128 = vsub.s32 %v1125, %v1127
        %v1129 = vrot.slane %v1115, %v1128
        %v1130 = vcombine.low %v1106, %v1122
        %v1131 = vcombine.high %v1106, %v1122
        %v1132 = vcombine.low %v1113, %v1129
        %v1133 = vcombine.high %v1113, %v1129
        %v1134 = vld [vmem:[#allocation2] sm:$0xff]
        %v1135 = vld [vmem:[#allocation2 + $0x8] sm:$0xff]
        %v1136 = vld [vmem:[#allocation2 + $0x10] sm:$0xff]
        %v1137 = vld [vmem:[#allocation2 + $0x18] sm:$0xff]
        %vm1138 = vcmask 64512
        %v1140 = vsel %vm1138, %v1130, 0
        %v1143 = vsel %vm1138, %v1134, 0
        %1145 = vmatprep.subr.mxu0 0.0
        %1146 = vmatpush1.xpose.msra.mxu0 0.0
        %1147 = vmatprep.subr.mxu0 0.0
        %1148 = vmatpush1.xpose.msra.mxu0 0.0
        %1149 = vmatprep.subr.mxu0 0.0
        %1150 = vmatpush1.xpose.msra.mxu0 0.0
        %1151 = vmatprep.subr.mxu0 0.0
        %1152 = vmatpush1.xpose.msra.mxu0 0.0
        %1153 = vmatprep.subr.mxu0 0.0
        %1154 = vmatpush1.xpose.msra.mxu0 0.0
        %1155 = vmatprep.subr.mxu0 0.0
        %1156 = vmatpush1.xpose.msra.mxu0 0.0
        %1157 = vmatprep.subr.mxu0 0.0
        %1158 = vmatpush1.xpose.msra.mxu0 0.0
        %1159 = vmatprep.subr.mxu0 0.0
        %1160 = vmatpush1.xpose.msra.mxu0 0.0
        %1161 = vmatprep.subr.mxu0 0.0
        %1162 = vmatpush1.xpose.msra.mxu0 0.0
        %1163 = vmatprep.subr.mxu0 0.0
        %1164 = vmatpush1.xpose.msra.mxu0 0.0
        %1165 = vmatprep.subr.mxu0 0.0
        %1166 = vmatpush1.xpose.msra.mxu0 0.0
        %1167 = vmatprep.subr.mxu0 0.0
        %1168 = vmatpush1.xpose.msra.mxu0 0.0
        %1169 = vmatprep.subr.mxu0 0.0
        %1170 = vmatpush1.xpose.msra.mxu0 0.0
        %1171 = vmatprep.subr.mxu0 0.0
        %1172 = vmatpush1.xpose.msra.mxu0 0.0
        %1173 = vmatprep.subr.mxu0 0.0
        %1174 = vmatpush1.xpose.msra.mxu0 0.0
        %1175 = vmatprep.subr.mxu0 0.0
        %1176 = vmatpush1.xpose.msra.mxu0 %v1143
        %1177 = vmatprep.subr.mxu0 0.0
        %1178 = vmatpush2.xpose.msra.mxu0 0.0
        %1179 = vmatprep.subr.mxu0 0.0
        %1180 = vmatpush2.xpose.msra.mxu0 0.0
        %1181 = vmatprep.subr.mxu0 0.0
        %1182 = vmatpush2.xpose.msra.mxu0 0.0
        %1183 = vmatprep.subr.mxu0 0.0
        %1184 = vmatpush2.xpose.msra.mxu0 0.0
        %1185 = vmatprep.subr.mxu0 0.0
        %1186 = vmatpush2.xpose.msra.mxu0 0.0
        %1187 = vmatprep.subr.mxu0 0.0
        %1188 = vmatpush2.xpose.msra.mxu0 0.0
        %1189 = vmatprep.subr.mxu0 0.0
        %1190 = vmatpush2.xpose.msra.mxu0 0.0
        %1191 = vmatprep.subr.mxu0 0.0
        %1192 = vmatpush2.xpose.msra.mxu0 0.0
        %1193 = vmatprep.subr.mxu0 0.0
        %1194 = vmatpush2.xpose.msra.mxu0 0.0
        %1195 = vmatprep.subr.mxu0 0.0
        %1196 = vmatpush2.xpose.msra.mxu0 0.0
        %1197 = vmatprep.subr.mxu0 0.0
        %1198 = vmatpush2.xpose.msra.mxu0 0.0
        %1199 = vmatprep.subr.mxu0 0.0
        %1200 = vmatpush2.xpose.msra.mxu0 0.0
        %1201 = vmatprep.subr.mxu0 0.0
        %1202 = vmatpush2.xpose.msra.mxu0 0.0
        %1203 = vmatprep.subr.mxu0 0.0
        %1204 = vmatpush2.xpose.msra.mxu0 0.0
        %1205 = vmatprep.subr.mxu0 0.0
        %1206 = vmatpush2.xpose.msra.mxu0 0.0
        %1207 = vmatprep.subr.mxu0 0.0
        %1208 = vmatpush2.xpose.msra.mxu0 0.0
        %1209 = vmatprep.mubr.f32.mxu0 0.0
        %1210 = vmatmul.mubr.f32.gmra.mxu0 %v1140
        %v1211 = vpop.f32.mrf.mxu0
        %v1212 = vadd.f32 0.0, %v1211
        %v1213 = vpop.f32.mrf.mxu0
        %1214 = vdwg.mxu0
        %v1216 = vsel %vm1138, %v1131, 0
        %v1219 = vsel %vm1138, %v1135, 0
        %1221 = vmatprep.subr.mxu0 0.0
        %1222 = vmatpush1.xpose.msra.mxu0 0.0
        %1223 = vmatprep.subr.mxu0 0.0
        %1224 = vmatpush1.xpose.msra.mxu0 0.0
        %1225 = vmatprep.subr.mxu0 0.0
        %1226 = vmatpush1.xpose.msra.mxu0 0.0
        %1227 = vmatprep.subr.mxu0 0.0
        %1228 = vmatpush1.xpose.msra.mxu0 0.0
        %1229 = vmatprep.subr.mxu0 0.0
        %1230 = vmatpush1.xpose.msra.mxu0 0.0
        %1231 = vmatprep.subr.mxu0 0.0
        %1232 = vmatpush1.xpose.msra.mxu0 0.0
        %1233 = vmatprep.subr.mxu0 0.0
        %1234 = vmatpush1.xpose.msra.mxu0 0.0
        %1235 = vmatprep.subr.mxu0 0.0
        %1236 = vmatpush1.xpose.msra.mxu0 0.0
        %1237 = vmatprep.subr.mxu0 0.0
        %1238 = vmatpush1.xpose.msra.mxu0 0.0
        %1239 = vmatprep.subr.mxu0 0.0
        %1240 = vmatpush1.xpose.msra.mxu0 0.0
        %1241 = vmatprep.subr.mxu0 0.0
        %1242 = vmatpush1.xpose.msra.mxu0 0.0
        %1243 = vmatprep.subr.mxu0 0.0
        %1244 = vmatpush1.xpose.msra.mxu0 0.0
        %1245 = vmatprep.subr.mxu0 0.0
        %1246 = vmatpush1.xpose.msra.mxu0 0.0
        %1247 = vmatprep.subr.mxu0 0.0
        %1248 = vmatpush1.xpose.msra.mxu0 0.0
        %1249 = vmatprep.subr.mxu0 0.0
        %1250 = vmatpush1.xpose.msra.mxu0 0.0
        %1251 = vmatprep.subr.mxu0 0.0
        %1252 = vmatpush1.xpose.msra.mxu0 %v1219
        %1253 = vmatprep.subr.mxu0 0.0
        %1254 = vmatpush2.xpose.msra.mxu0 0.0
        %1255 = vmatprep.subr.mxu0 0.0
        %1256 = vmatpush2.xpose.msra.mxu0 0.0
        %1257 = vmatprep.subr.mxu0 0.0
        %1258 = vmatpush2.xpose.msra.mxu0 0.0
        %1259 = vmatprep.subr.mxu0 0.0
        %1260 = vmatpush2.xpose.msra.mxu0 0.0
        %1261 = vmatprep.subr.mxu0 0.0
        %1262 = vmatpush2.xpose.msra.mxu0 0.0
        %1263 = vmatprep.subr.mxu0 0.0
        %1264 = vmatpush2.xpose.msra.mxu0 0.0
        %1265 = vmatprep.subr.mxu0 0.0
        %1266 = vmatpush2.xpose.msra.mxu0 0.0
        %1267 = vmatprep.subr.mxu0 0.0
        %1268 = vmatpush2.xpose.msra.mxu0 0.0
        %1269 = vmatprep.subr.mxu0 0.0
        %1270 = vmatpush2.xpose.msra.mxu0 0.0
        %1271 = vmatprep.subr.mxu0 0.0
        %1272 = vmatpush2.xpose.msra.mxu0 0.0
        %1273 = vmatprep.subr.mxu0 0.0
        %1274 = vmatpush2.xpose.msra.mxu0 0.0
        %1275 = vmatprep.subr.mxu0 0.0
        %1276 = vmatpush2.xpose.msra.mxu0 0.0
        %1277 = vmatprep.subr.mxu0 0.0
        %1278 = vmatpush2.xpose.msra.mxu0 0.0
        %1279 = vmatprep.subr.mxu0 0.0
        %1280 = vmatpush2.xpose.msra.mxu0 0.0
        %1281 = vmatprep.subr.mxu0 0.0
        %1282 = vmatpush2.xpose.msra.mxu0 0.0
        %1283 = vmatprep.subr.mxu0 0.0
        %1284 = vmatpush2.xpose.msra.mxu0 0.0
        %1285 = vmatprep.mubr.f32.mxu0 0.0
        %1286 = vmatmul.mubr.f32.gmra.mxu0 %v1216
        %v1287 = vpop.f32.mrf.mxu0
        %v1288 = vadd.f32 0.0, %v1287
        %v1289 = vpop.f32.mrf.mxu0
        %1290 = vdwg.mxu0
        %v1292 = vsel %vm1138, %v1132, 0
        %v1295 = vsel %vm1138, %v1136, 0
        %1297 = vmatprep.subr.mxu0 0.0
        %1298 = vmatpush1.xpose.msra.mxu0 0.0
        %1299 = vmatprep.subr.mxu0 0.0
        %1300 = vmatpush1.xpose.msra.mxu0 0.0
        %1301 = vmatprep.subr.mxu0 0.0
        %1302 = vmatpush1.xpose.msra.mxu0 0.0
        %1303 = vmatprep.subr.mxu0 0.0
        %1304 = vmatpush1.xpose.msra.mxu0 0.0
        %1305 = vmatprep.subr.mxu0 0.0
        %1306 = vmatpush1.xpose.msra.mxu0 0.0
        %1307 = vmatprep.subr.mxu0 0.0
        %1308 = vmatpush1.xpose.msra.mxu0 0.0
        %1309 = vmatprep.subr.mxu0 0.0
        %1310 = vmatpush1.xpose.msra.mxu0 0.0
        %1311 = vmatprep.subr.mxu0 0.0
        %1312 = vmatpush1.xpose.msra.mxu0 0.0
        %1313 = vmatprep.subr.mxu0 0.0
        %1314 = vmatpush1.xpose.msra.mxu0 0.0
        %1315 = vmatprep.subr.mxu0 0.0
        %1316 = vmatpush1.xpose.msra.mxu0 0.0
        %1317 = vmatprep.subr.mxu0 0.0
        %1318 = vmatpush1.xpose.msra.mxu0 0.0
        %1319 = vmatprep.subr.mxu0 0.0
        %1320 = vmatpush1.xpose.msra.mxu0 0.0
        %1321 = vmatprep.subr.mxu0 0.0
        %1322 = vmatpush1.xpose.msra.mxu0 0.0
        %1323 = vmatprep.subr.mxu0 0.0
        %1324 = vmatpush1.xpose.msra.mxu0 0.0
        %1325 = vmatprep.subr.mxu0 0.0
        %1326 = vmatpush1.xpose.msra.mxu0 0.0
        %1327 = vmatprep.subr.mxu0 0.0
        %1328 = vmatpush1.xpose.msra.mxu0 %v1295
        %1329 = vmatprep.subr.mxu0 0.0
        %1330 = vmatpush2.xpose.msra.mxu0 0.0
        %1331 = vmatprep.subr.mxu0 0.0
        %1332 = vmatpush2.xpose.msra.mxu0 0.0
        %1333 = vmatprep.subr.mxu0 0.0
        %1334 = vmatpush2.xpose.msra.mxu0 0.0
        %1335 = vmatprep.subr.mxu0 0.0
        %1336 = vmatpush2.xpose.msra.mxu0 0.0
        %1337 = vmatprep.subr.mxu0 0.0
        %1338 = vmatpush2.xpose.msra.mxu0 0.0
        %1339 = vmatprep.subr.mxu0 0.0
        %1340 = vmatpush2.xpose.msra.mxu0 0.0
        %1341 = vmatprep.subr.mxu0 0.0
        %1342 = vmatpush2.xpose.msra.mxu0 0.0
        %1343 = vmatprep.subr.mxu0 0.0
        %1344 = vmatpush2.xpose.msra.mxu0 0.0
        %1345 = vmatprep.subr.mxu0 0.0
        %1346 = vmatpush2.xpose.msra.mxu0 0.0
        %1347 = vmatprep.subr.mxu0 0.0
        %1348 = vmatpush2.xpose.msra.mxu0 0.0
        %1349 = vmatprep.subr.mxu0 0.0
        %1350 = vmatpush2.xpose.msra.mxu0 0.0
        %1351 = vmatprep.subr.mxu0 0.0
        %1352 = vmatpush2.xpose.msra.mxu0 0.0
        %1353 = vmatprep.subr.mxu0 0.0
        %1354 = vmatpush2.xpose.msra.mxu0 0.0
        %1355 = vmatprep.subr.mxu0 0.0
        %1356 = vmatpush2.xpose.msra.mxu0 0.0
        %1357 = vmatprep.subr.mxu0 0.0
        %1358 = vmatpush2.xpose.msra.mxu0 0.0
        %1359 = vmatprep.subr.mxu0 0.0
        %1360 = vmatpush2.xpose.msra.mxu0 0.0
        %1361 = vmatprep.mubr.f32.mxu0 0.0
        %1362 = vmatmul.mubr.f32.gmra.mxu0 %v1292
        %v1363 = vpop.f32.mrf.mxu0
        %v1364 = vadd.f32 0.0, %v1363
        %v1365 = vpop.f32.mrf.mxu0
        %1366 = vdwg.mxu0
        %v1368 = vsel %vm1138, %v1133, 0
        %v1371 = vsel %vm1138, %v1137, 0
        %1373 = vmatprep.subr.mxu0 0.0
        %1374 = vmatpush1.xpose.msra.mxu0 0.0
        %1375 = vmatprep.subr.mxu0 0.0
        %1376 = vmatpush1.xpose.msra.mxu0 0.0
        %1377 = vmatprep.subr.mxu0 0.0
        %1378 = vmatpush1.xpose.msra.mxu0 0.0
        %1379 = vmatprep.subr.mxu0 0.0
        %1380 = vmatpush1.xpose.msra.mxu0 0.0
        %1381 = vmatprep.subr.mxu0 0.0
        %1382 = vmatpush1.xpose.msra.mxu0 0.0
        %1383 = vmatprep.subr.mxu0 0.0
        %1384 = vmatpush1.xpose.msra.mxu0 0.0
        %1385 = vmatprep.subr.mxu0 0.0
        %1386 = vmatpush1.xpose.msra.mxu0 0.0
        %1387 = vmatprep.subr.mxu0 0.0
        %1388 = vmatpush1.xpose.msra.mxu0 0.0
        %1389 = vmatprep.subr.mxu0 0.0
        %1390 = vmatpush1.xpose.msra.mxu0 0.0
        %1391 = vmatprep.subr.mxu0 0.0
        %1392 = vmatpush1.xpose.msra.mxu0 0.0
        %1393 = vmatprep.subr.mxu0 0.0
        %1394 = vmatpush1.xpose.msra.mxu0 0.0
        %1395 = vmatprep.subr.mxu0 0.0
        %1396 = vmatpush1.xpose.msra.mxu0 0.0
        %1397 = vmatprep.subr.mxu0 0.0
        %1398 = vmatpush1.xpose.msra.mxu0 0.0
        %1399 = vmatprep.subr.mxu0 0.0
        %1400 = vmatpush1.xpose.msra.mxu0 0.0
        %1401 = vmatprep.subr.mxu0 0.0
        %1402 = vmatpush1.xpose.msra.mxu0 0.0
        %1403 = vmatprep.subr.mxu0 0.0
        %1404 = vmatpush1.xpose.msra.mxu0 %v1371
        %1405 = vmatprep.subr.mxu0 0.0
        %1406 = vmatpush2.xpose.msra.mxu0 0.0
        %1407 = vmatprep.subr.mxu0 0.0
        %1408 = vmatpush2.xpose.msra.mxu0 0.0
        %1409 = vmatprep.subr.mxu0 0.0
        %1410 = vmatpush2.xpose.msra.mxu0 0.0
        %1411 = vmatprep.subr.mxu0 0.0
        %1412 = vmatpush2.xpose.msra.mxu0 0.0
        %1413 = vmatprep.subr.mxu0 0.0
        %1414 = vmatpush2.xpose.msra.mxu0 0.0
        %1415 = vmatprep.subr.mxu0 0.0
        %1416 = vmatpush2.xpose.msra.mxu0 0.0
        %1417 = vmatprep.subr.mxu0 0.0
        %1418 = vmatpush2.xpose.msra.mxu0 0.0
        %1419 = vmatprep.subr.mxu0 0.0
        %1420 = vmatpush2.xpose.msra.mxu0 0.0
        %1421 = vmatprep.subr.mxu0 0.0
        %1422 = vmatpush2.xpose.msra.mxu0 0.0
        %1423 = vmatprep.subr.mxu0 0.0
        %1424 = vmatpush2.xpose.msra.mxu0 0.0
        %1425 = vmatprep.subr.mxu0 0.0
        %1426 = vmatpush2.xpose.msra.mxu0 0.0
        %1427 = vmatprep.subr.mxu0 0.0
        %1428 = vmatpush2.xpose.msra.mxu0 0.0
        %1429 = vmatprep.subr.mxu0 0.0
        %1430 = vmatpush2.xpose.msra.mxu0 0.0
        %1431 = vmatprep.subr.mxu0 0.0
        %1432 = vmatpush2.xpose.msra.mxu0 0.0
        %1433 = vmatprep.subr.mxu0 0.0
        %1434 = vmatpush2.xpose.msra.mxu0 0.0
        %1435 = vmatprep.subr.mxu0 0.0
        %1436 = vmatpush2.xpose.msra.mxu0 0.0
        %1437 = vmatprep.mubr.f32.mxu0 0.0
        %1438 = vmatmul.mubr.f32.gmra.mxu0 %v1368
        %v1439 = vpop.f32.mrf.mxu0
        %v1440 = vadd.f32 0.0, %v1439
        %v1441 = vpop.f32.mrf.mxu0
        %1442 = vdwg.mxu0
        %v1443 = vmul.f32 %v1212, 0.35355338
        %v1444 = vmul.f32 %v1288, 0.35355338
        %v1445 = vmul.f32 %v1364, 0.35355338
        %v1446 = vmul.f32 %v1440, 0.35355338
        %v1447 = vsel %vm1138, %v1443, -inf
        %1448 = vmax.xlane.f32.xlu0 %v1447
        %v1449 = vpop.xlane.xlu0 %1448
        %v1450 = vsel %vm1138, %v1444, -inf
        %1451 = vmax.xlane.f32.xlu0 %v1450
        %v1452 = vpop.xlane.xlu0 %1451
        %v1453 = vsel %vm1138, %v1445, -inf
        %1454 = vmax.xlane.f32.xlu0 %v1453
        %v1455 = vpop.xlane.xlu0 %1454
        %v1456 = vsel %vm1138, %v1446, -inf
        %1457 = vmax.xlane.f32.xlu0 %v1456
        %v1458 = vpop.xlane.xlu0 %1457
        %v1459 = vsub.f32 %v1443, %v1449
        %v1460 = vsub.f32 %v1444, %v1452
        %v1461 = vsub.f32 %v1445, %v1455
        %v1462 = vsub.f32 %v1446, %v1458
        %v1463 = vmul.f32 %v1459, 1.442695
        %v1464 = vpow.pop %v1463
        %v1465 = vmul.f32 %v1460, 1.442695
        %v1466 = vpow.pop %v1465
        %v1467 = vmul.f32 %v1461, 1.442695
        %v1468 = vpow.pop %v1467
        %v1469 = vmul.f32 %v1462, 1.442695
        %v1470 = vpow.pop %v1469
        %v1471 = vsel %vm1138, %v1464, 0.0
        %1472 = vadd.xlane.f32.xlu0 %v1471
        %v1473 = vpop.xlane.xlu0 %1472
        %v1474 = vsel %vm1138, %v1466, 0.0
        %1475 = vadd.xlane.f32.xlu0 %v1474
        %v1476 = vpop.xlane.xlu0 %1475
        %v1477 = vsel %vm1138, %v1468, 0.0
        %1478 = vadd.xlane.f32.xlu0 %v1477
        %v1479 = vpop.xlane.xlu0 %1478
        %v1480 = vsel %vm1138, %v1470, 0.0
        %1481 = vadd.xlane.f32.xlu0 %v1480
        %v1482 = vpop.xlane.xlu0 %1481
        %v1483 = vrcp.pop %v1473
        %v1484 = vmul.f32 %v1464, %v1483
        %v1485 = vrcp.pop %v1476
        %v1486 = vmul.f32 %v1466, %v1485
        %v1487 = vrcp.pop %v1479
        %v1488 = vmul.f32 %v1468, %v1487
        %v1489 = vrcp.pop %v1482
        %v1490 = vmul.f32 %v1470, %v1489
        %1491 = vst.msk [vmem:[%s522] sm:$0xff] %vm1138, %v1484
        %1492 = vst.msk [vmem:[%s522 + $0x8] sm:$0xff] %vm1138, %v1486
        %1493 = vst.msk [vmem:[%s522 + $0x10] sm:$0xff] %vm1138, %v1488
        %1494 = vst.msk [vmem:[%s522 + $0x18] sm:$0xff] %vm1138, %v1490
        %v1495 = vld [vmem:[#allocation3] sm:$0xff]
        %v1496 = vld [vmem:[#allocation3 + $0x8] sm:$0xff]
        %v1497 = vld [vmem:[#allocation3 + $0x10] sm:$0xff]
        %v1498 = vld [vmem:[#allocation3 + $0x18] sm:$0xff]
        %v1500 = vsel %vm1138, %v1484, 0
        %1502 = vmatprep.subr.mxu0 0.0
        %1503 = vmatpush1.msra.mxu0 0.0
        %1504 = vmatprep.subr.mxu0 0.0
        %1505 = vmatpush1.msra.mxu0 0.0
        %1506 = vmatprep.subr.mxu0 0.0
        %1507 = vmatpush1.msra.mxu0 0.0
        %1508 = vmatprep.subr.mxu0 0.0
        %1509 = vmatpush1.msra.mxu0 0.0
        %1510 = vmatprep.subr.mxu0 0.0
        %1511 = vmatpush1.msra.mxu0 0.0
        %1512 = vmatprep.subr.mxu0 0.0
        %1513 = vmatpush1.msra.mxu0 0.0
        %1514 = vmatprep.subr.mxu0 0.0
        %1515 = vmatpush1.msra.mxu0 0.0
        %1516 = vmatprep.subr.mxu0 0.0
        %1517 = vmatpush1.msra.mxu0 0.0
        %1518 = vmatprep.subr.mxu0 0.0
        %1519 = vmatpush1.msra.mxu0 0.0
        %1520 = vmatprep.subr.mxu0 0.0
        %1521 = vmatpush1.msra.mxu0 0.0
        %1522 = vmatprep.subr.mxu0 0.0
        %1523 = vmatpush1.msra.mxu0 0.0
        %1524 = vmatprep.subr.mxu0 0.0
        %1525 = vmatpush1.msra.mxu0 0.0
        %1526 = vmatprep.subr.mxu0 0.0
        %1527 = vmatpush1.msra.mxu0 0.0
        %1528 = vmatprep.subr.mxu0 0.0
        %1529 = vmatpush1.msra.mxu0 0.0
        %1530 = vmatprep.subr.mxu0 0.0
        %1531 = vmatpush1.msra.mxu0 0.0
        %1532 = vmatprep.subr.mxu0 0.0
        %1533 = vmatpush1.msra.mxu0 %v1495
        %1534 = vmatprep.subr.mxu0 0.0
        %1535 = vmatpush2.msra.mxu0 0.0
        %1536 = vmatprep.subr.mxu0 0.0
        %1537 = vmatpush2.msra.mxu0 0.0
        %1538 = vmatprep.subr.mxu0 0.0
        %1539 = vmatpush2.msra.mxu0 0.0
        %1540 = vmatprep.subr.mxu0 0.0
        %1541 = vmatpush2.msra.mxu0 0.0
        %1542 = vmatprep.subr.mxu0 0.0
        %1543 = vmatpush2.msra.mxu0 0.0
        %1544 = vmatprep.subr.mxu0 0.0
        %1545 = vmatpush2.msra.mxu0 0.0
        %1546 = vmatprep.subr.mxu0 0.0
        %1547 = vmatpush2.msra.mxu0 0.0
        %1548 = vmatprep.subr.mxu0 0.0
        %1549 = vmatpush2.msra.mxu0 0.0
        %1550 = vmatprep.subr.mxu0 0.0
        %1551 = vmatpush2.msra.mxu0 0.0
        %1552 = vmatprep.subr.mxu0 0.0
        %1553 = vmatpush2.msra.mxu0 0.0
        %1554 = vmatprep.subr.mxu0 0.0
        %1555 = vmatpush2.msra.mxu0 0.0
        %1556 = vmatprep.subr.mxu0 0.0
        %1557 = vmatpush2.msra.mxu0 0.0
        %1558 = vmatprep.subr.mxu0 0.0
        %1559 = vmatpush2.msra.mxu0 0.0
        %1560 = vmatprep.subr.mxu0 0.0
        %1561 = vmatpush2.msra.mxu0 0.0
        %1562 = vmatprep.subr.mxu0 0.0
        %1563 = vmatpush2.msra.mxu0 0.0
        %1564 = vmatprep.subr.mxu0 0.0
        %1565 = vmatpush2.msra.mxu0 0.0
        %1566 = vmatprep.mubr.f32.mxu0 0.0
        %1567 = vmatmul.mubr.f32.gmra.mxu0 %v1500
        %v1568 = vpop.f32.mrf.mxu0
        %v1569 = vadd.f32 0.0, %v1568
        %v1570 = vpop.f32.mrf.mxu0
        %1571 = vdwg.mxu0
        %v1573 = vsel %vm1138, %v1486, 0
        %1575 = vmatprep.subr.mxu0 0.0
        %1576 = vmatpush1.msra.mxu0 0.0
        %1577 = vmatprep.subr.mxu0 0.0
        %1578 = vmatpush1.msra.mxu0 0.0
        %1579 = vmatprep.subr.mxu0 0.0
        %1580 = vmatpush1.msra.mxu0 0.0
        %1581 = vmatprep.subr.mxu0 0.0
        %1582 = vmatpush1.msra.mxu0 0.0
        %1583 = vmatprep.subr.mxu0 0.0
        %1584 = vmatpush1.msra.mxu0 0.0
        %1585 = vmatprep.subr.mxu0 0.0
        %1586 = vmatpush1.msra.mxu0 0.0
        %1587 = vmatprep.subr.mxu0 0.0
        %1588 = vmatpush1.msra.mxu0 0.0
        %1589 = vmatprep.subr.mxu0 0.0
        %1590 = vmatpush1.msra.mxu0 0.0
        %1591 = vmatprep.subr.mxu0 0.0
        %1592 = vmatpush1.msra.mxu0 0.0
        %1593 = vmatprep.subr.mxu0 0.0
        %1594 = vmatpush1.msra.mxu0 0.0
        %1595 = vmatprep.subr.mxu0 0.0
        %1596 = vmatpush1.msra.mxu0 0.0
        %1597 = vmatprep.subr.mxu0 0.0
        %1598 = vmatpush1.msra.mxu0 0.0
        %1599 = vmatprep.subr.mxu0 0.0
        %1600 = vmatpush1.msra.mxu0 0.0
        %1601 = vmatprep.subr.mxu0 0.0
        %1602 = vmatpush1.msra.mxu0 0.0
        %1603 = vmatprep.subr.mxu0 0.0
        %1604 = vmatpush1.msra.mxu0 0.0
        %1605 = vmatprep.subr.mxu0 0.0
        %1606 = vmatpush1.msra.mxu0 %v1496
        %1607 = vmatprep.subr.mxu0 0.0
        %1608 = vmatpush2.msra.mxu0 0.0
        %1609 = vmatprep.subr.mxu0 0.0
        %1610 = vmatpush2.msra.mxu0 0.0
        %1611 = vmatprep.subr.mxu0 0.0
        %1612 = vmatpush2.msra.mxu0 0.0
        %1613 = vmatprep.subr.mxu0 0.0
        %1614 = vmatpush2.msra.mxu0 0.0
        %1615 = vmatprep.subr.mxu0 0.0
        %1616 = vmatpush2.msra.mxu0 0.0
        %1617 = vmatprep.subr.mxu0 0.0
        %1618 = vmatpush2.msra.mxu0 0.0
        %1619 = vmatprep.subr.mxu0 0.0
        %1620 = vmatpush2.msra.mxu0 0.0
        %1621 = vmatprep.subr.mxu0 0.0
        %1622 = vmatpush2.msra.mxu0 0.0
        %1623 = vmatprep.subr.mxu0 0.0
        %1624 = vmatpush2.msra.mxu0 0.0
        %1625 = vmatprep.subr.mxu0 0.0
        %1626 = vmatpush2.msra.mxu0 0.0
        %1627 = vmatprep.subr.mxu0 0.0
        %1628 = vmatpush2.msra.mxu0 0.0
        %1629 = vmatprep.subr.mxu0 0.0
        %1630 = vmatpush2.msra.mxu0 0.0
        %1631 = vmatprep.subr.mxu0 0.0
        %1632 = vmatpush2.msra.mxu0 0.0
        %1633 = vmatprep.subr.mxu0 0.0
        %1634 = vmatpush2.msra.mxu0 0.0
        %1635 = vmatprep.subr.mxu0 0.0
        %1636 = vmatpush2.msra.mxu0 0.0
        %1637 = vmatprep.subr.mxu0 0.0
        %1638 = vmatpush2.msra.mxu0 0.0
        %1639 = vmatprep.mubr.f32.mxu0 0.0
        %1640 = vmatmul.mubr.f32.gmra.mxu0 %v1573
        %v1641 = vpop.f32.mrf.mxu0
        %v1642 = vadd.f32 0.0, %v1641
        %v1643 = vpop.f32.mrf.mxu0
        %1644 = vdwg.mxu0
        %v1646 = vsel %vm1138, %v1488, 0
        %1648 = vmatprep.subr.mxu0 0.0
        %1649 = vmatpush1.msra.mxu0 0.0
        %1650 = vmatprep.subr.mxu0 0.0
        %1651 = vmatpush1.msra.mxu0 0.0
        %1652 = vmatprep.subr.mxu0 0.0
        %1653 = vmatpush1.msra.mxu0 0.0
        %1654 = vmatprep.subr.mxu0 0.0
        %1655 = vmatpush1.msra.mxu0 0.0
        %1656 = vmatprep.subr.mxu0 0.0
        %1657 = vmatpush1.msra.mxu0 0.0
        %1658 = vmatprep.subr.mxu0 0.0
        %1659 = vmatpush1.msra.mxu0 0.0
        %1660 = vmatprep.subr.mxu0 0.0
        %1661 = vmatpush1.msra.mxu0 0.0
        %1662 = vmatprep.subr.mxu0 0.0
        %1663 = vmatpush1.msra.mxu0 0.0
        %1664 = vmatprep.subr.mxu0 0.0
        %1665 = vmatpush1.msra.mxu0 0.0
        %1666 = vmatprep.subr.mxu0 0.0
        %1667 = vmatpush1.msra.mxu0 0.0
        %1668 = vmatprep.subr.mxu0 0.0
        %1669 = vmatpush1.msra.mxu0 0.0
        %1670 = vmatprep.subr.mxu0 0.0
        %1671 = vmatpush1.msra.mxu0 0.0
        %1672 = vmatprep.subr.mxu0 0.0
        %1673 = vmatpush1.msra.mxu0 0.0
        %1674 = vmatprep.subr.mxu0 0.0
        %1675 = vmatpush1.msra.mxu0 0.0
        %1676 = vmatprep.subr.mxu0 0.0
        %1677 = vmatpush1.msra.mxu0 0.0
        %1678 = vmatprep.subr.mxu0 0.0
        %1679 = vmatpush1.msra.mxu0 %v1497
        %1680 = vmatprep.subr.mxu0 0.0
        %1681 = vmatpush2.msra.mxu0 0.0
        %1682 = vmatprep.subr.mxu0 0.0
        %1683 = vmatpush2.msra.mxu0 0.0
        %1684 = vmatprep.subr.mxu0 0.0
        %1685 = vmatpush2.msra.mxu0 0.0
        %1686 = vmatprep.subr.mxu0 0.0
        %1687 = vmatpush2.msra.mxu0 0.0
        %1688 = vmatprep.subr.mxu0 0.0
        %1689 = vmatpush2.msra.mxu0 0.0
        %1690 = vmatprep.subr.mxu0 0.0
        %1691 = vmatpush2.msra.mxu0 0.0
        %1692 = vmatprep.subr.mxu0 0.0
        %1693 = vmatpush2.msra.mxu0 0.0
        %1694 = vmatprep.subr.mxu0 0.0
        %1695 = vmatpush2.msra.mxu0 0.0
        %1696 = vmatprep.subr.mxu0 0.0
        %1697 = vmatpush2.msra.mxu0 0.0
        %1698 = vmatprep.subr.mxu0 0.0
        %1699 = vmatpush2.msra.mxu0 0.0
        %1700 = vmatprep.subr.mxu0 0.0
        %1701 = vmatpush2.msra.mxu0 0.0
        %1702 = vmatprep.subr.mxu0 0.0
        %1703 = vmatpush2.msra.mxu0 0.0
        %1704 = vmatprep.subr.mxu0 0.0
        %1705 = vmatpush2.msra.mxu0 0.0
        %1706 = vmatprep.subr.mxu0 0.0
        %1707 = vmatpush2.msra.mxu0 0.0
        %1708 = vmatprep.subr.mxu0 0.0
        %1709 = vmatpush2.msra.mxu0 0.0
        %1710 = vmatprep.subr.mxu0 0.0
        %1711 = vmatpush2.msra.mxu0 0.0
        %1712 = vmatprep.mubr.f32.mxu0 0.0
        %1713 = vmatmul.mubr.f32.gmra.mxu0 %v1646
        %v1714 = vpop.f32.mrf.mxu0
        %v1715 = vadd.f32 0.0, %v1714
        %v1716 = vpop.f32.mrf.mxu0
        %1717 = vdwg.mxu0
        %v1719 = vsel %vm1138, %v1490, 0
        %1721 = vmatprep.subr.mxu0 0.0
        %1722 = vmatpush1.msra.mxu0 0.0
        %1723 = vmatprep.subr.mxu0 0.0
        %1724 = vmatpush1.msra.mxu0 0.0
        %1725 = vmatprep.subr.mxu0 0.0
        %1726 = vmatpush1.msra.mxu0 0.0
        %1727 = vmatprep.subr.mxu0 0.0
        %1728 = vmatpush1.msra.mxu0 0.0
        %1729 = vmatprep.subr.mxu0 0.0
        %1730 = vmatpush1.msra.mxu0 0.0
        %1731 = vmatprep.subr.mxu0 0.0
        %1732 = vmatpush1.msra.mxu0 0.0
        %1733 = vmatprep.subr.mxu0 0.0
        %1734 = vmatpush1.msra.mxu0 0.0
        %1735 = vmatprep.subr.mxu0 0.0
        %1736 = vmatpush1.msra.mxu0 0.0
        %1737 = vmatprep.subr.mxu0 0.0
        %1738 = vmatpush1.msra.mxu0 0.0
        %1739 = vmatprep.subr.mxu0 0.0
        %1740 = vmatpush1.msra.mxu0 0.0
        %1741 = vmatprep.subr.mxu0 0.0
        %1742 = vmatpush1.msra.mxu0 0.0
        %1743 = vmatprep.subr.mxu0 0.0
        %1744 = vmatpush1.msra.mxu0 0.0
        %1745 = vmatprep.subr.mxu0 0.0
        %1746 = vmatpush1.msra.mxu0 0.0
        %1747 = vmatprep.subr.mxu0 0.0
        %1748 = vmatpush1.msra.mxu0 0.0
        %1749 = vmatprep.subr.mxu0 0.0
        %1750 = vmatpush1.msra.mxu0 0.0
        %1751 = vmatprep.subr.mxu0 0.0
        %1752 = vmatpush1.msra.mxu0 %v1498
        %1753 = vmatprep.subr.mxu0 0.0
        %1754 = vmatpush2.msra.mxu0 0.0
        %1755 = vmatprep.subr.mxu0 0.0
        %1756 = vmatpush2.msra.mxu0 0.0
        %1757 = vmatprep.subr.mxu0 0.0
        %1758 = vmatpush2.msra.mxu0 0.0
        %1759 = vmatprep.subr.mxu0 0.0
        %1760 = vmatpush2.msra.mxu0 0.0
        %1761 = vmatprep.subr.mxu0 0.0
        %1762 = vmatpush2.msra.mxu0 0.0
        %1763 = vmatprep.subr.mxu0 0.0
        %1764 = vmatpush2.msra.mxu0 0.0
        %1765 = vmatprep.subr.mxu0 0.0
        %1766 = vmatpush2.msra.mxu0 0.0
        %1767 = vmatprep.subr.mxu0 0.0
        %1768 = vmatpush2.msra.mxu0 0.0
        %1769 = vmatprep.subr.mxu0 0.0
        %1770 = vmatpush2.msra.mxu0 0.0
        %1771 = vmatprep.subr.mxu0 0.0
        %1772 = vmatpush2.msra.mxu0 0.0
        %1773 = vmatprep.subr.mxu0 0.0
        %1774 = vmatpush2.msra.mxu0 0.0
        %1775 = vmatprep.subr.mxu0 0.0
        %1776 = vmatpush2.msra.mxu0 0.0
        %1777 = vmatprep.subr.mxu0 0.0
        %1778 = vmatpush2.msra.mxu0 0.0
        %1779 = vmatprep.subr.mxu0 0.0
        %1780 = vmatpush2.msra.mxu0 0.0
        %1781 = vmatprep.subr.mxu0 0.0
        %1782 = vmatpush2.msra.mxu0 0.0
        %1783 = vmatprep.subr.mxu0 0.0
        %1784 = vmatpush2.msra.mxu0 0.0
        %1785 = vmatprep.mubr.f32.mxu0 0.0
        %1786 = vmatmul.mubr.f32.gmra.mxu0 %v1719
        %v1787 = vpop.f32.mrf.mxu0
        %v1788 = vadd.f32 0.0, %v1787
        %v1789 = vpop.f32.mrf.mxu0
        %1790 = vdwg.mxu0
        %v1791 = vcombine.low %v1569, %v1715
        %v1792 = vcombine.high %v1569, %v1715
        %v1794 = vunpack.c.l.s4 1983009808
        %v1795 = vunpack.c.0.s8 %v1794
        %v1796 = vlaneseq
        %v1797 = vshrl.u32 %v1796, 7
        %v1798 = vsub.s32 %v1795, %v1797
        %v1799 = vrot.slane %v1791, %v1798
        %v1801 = vunpack.c.l.s4 1983009808
        %v1802 = vunpack.c.0.s8 %v1801
        %v1803 = vlaneseq
        %v1804 = vshrl.u32 %v1803, 7
        %v1805 = vsub.s32 %v1802, %v1804
        %v1806 = vrot.slane %v1792, %v1805
        %v1807 = vcombine.low %v1642, %v1788
        %v1808 = vcombine.high %v1642, %v1788
        %v1810 = vunpack.c.l.s4 1983009808
        %v1811 = vunpack.c.0.s8 %v1810
        %v1812 = vlaneseq
        %v1813 = vshrl.u32 %v1812, 7
        %v1814 = vsub.s32 %v1811, %v1813
        %v1815 = vrot.slane %v1807, %v1814
        %v1817 = vunpack.c.l.s4 1983009808
        %v1818 = vunpack.c.0.s8 %v1817
        %v1819 = vlaneseq
        %v1820 = vshrl.u32 %v1819, 7
        %v1821 = vsub.s32 %v1818, %v1820
        %v1822 = vrot.slane %v1808, %v1821
        %v1823 = vcombine.low %v1799, %v1815
        %v1824 = vcombine.high %v1799, %v1815
        %v1826 = vunpack.c.l.s4 1934713408
        %v1827 = vunpack.c.0.s8 %v1826
        %v1828 = vlaneseq
        %v1829 = vshrl.u32 %v1828, 7
        %v1830 = vsub.s32 %v1827, %v1829
        %v1831 = vrot.slane %v1823, %v1830
        %v1833 = vunpack.c.l.s4 1934713408
        %v1834 = vunpack.c.0.s8 %v1833
        %v1835 = vlaneseq
        %v1836 = vshrl.u32 %v1835, 7
        %v1837 = vsub.s32 %v1834, %v1836
        %v1838 = vrot.slane %v1824, %v1837
        %v1839 = vcombine.low %v1806, %v1822
        %v1840 = vcombine.high %v1806, %v1822
        %v1842 = vunpack.c.l.s4 1934713408
        %v1843 = vunpack.c.0.s8 %v1842
        %v1844 = vlaneseq
        %v1845 = vshrl.u32 %v1844, 7
        %v1846 = vsub.s32 %v1843, %v1845
        %v1847 = vrot.slane %v1839, %v1846
        %v1849 = vunpack.c.l.s4 1934713408
        %v1850 = vunpack.c.0.s8 %v1849
        %v1851 = vlaneseq
        %v1852 = vshrl.u32 %v1851, 7
        %v1853 = vsub.s32 %v1850, %v1852
        %v1854 = vrot.slane %v1840, %v1853
        %v1855 = vcombine.high %v1831, 0.0
        %v1856 = vcombine.high %v1838, 0.0
        %v1857 = vcombine.high %v1847, 0.0
        %v1858 = vcombine.high %v1854, 0.0
        %v1859 = vcombine.low %v1831, %v1838
        %v1861 = vunpack.c.l.s4 1983009808
        %v1862 = vunpack.c.0.s8 %v1861
        %v1863 = vlaneseq
        %v1864 = vshrl.u32 %v1863, 7
        %v1865 = vsub.s32 %v1862, %v1864
        %v1866 = vrot.slane %v1859, %v1865
        %v1867 = vcombine.low %v1855, %v1856
        %v1869 = vunpack.c.l.s4 1983009808
        %v1870 = vunpack.c.0.s8 %v1869
        %v1871 = vlaneseq
        %v1872 = vshrl.u32 %v1871, 7
        %v1873 = vsub.s32 %v1870, %v1872
        %v1874 = vrot.slane %v1867, %v1873
        %v1875 = vcombine.low %v1847, %v1854
        %v1877 = vunpack.c.l.s4 1983009808
        %v1878 = vunpack.c.0.s8 %v1877
        %v1879 = vlaneseq
        %v1880 = vshrl.u32 %v1879, 7
        %v1881 = vsub.s32 %v1878, %v1880
        %v1882 = vrot.slane %v1875, %v1881
        %v1883 = vcombine.low %v1857, %v1858
        %v1885 = vunpack.c.l.s4 1983009808
        %v1886 = vunpack.c.0.s8 %v1885
        %v1887 = vlaneseq
        %v1888 = vshrl.u32 %v1887, 7
        %v1889 = vsub.s32 %v1886, %v1888
        %v1890 = vrot.slane %v1883, %v1889
        %v1891 = vcombine.low %v1866, %v1874
        %v1892 = vcombine.high %v1866, %v1874
        %v1894 = vunpack.c.l.s4 1934713408
        %v1895 = vunpack.c.0.s8 %v1894
        %v1896 = vlaneseq
        %v1897 = vshrl.u32 %v1896, 7
        %v1898 = vsub.s32 %v1895, %v1897
        %v1899 = vrot.slane %v1891, %v1898
        %v1901 = vunpack.c.l.s4 1934713408
        %v1902 = vunpack.c.0.s8 %v1901
        %v1903 = vlaneseq
        %v1904 = vshrl.u32 %v1903, 7
        %v1905 = vsub.s32 %v1902, %v1904
        %v1906 = vrot.slane %v1892, %v1905
        %v1907 = vcombine.low %v1882, %v1890
        %v1908 = vcombine.high %v1882, %v1890
        %v1910 = vunpack.c.l.s4 1934713408
        %v1911 = vunpack.c.0.s8 %v1910
        %v1912 = vlaneseq
        %v1913 = vshrl.u32 %v1912, 7
        %v1914 = vsub.s32 %v1911, %v1913
        %v1915 = vrot.slane %v1907, %v1914
        %v1917 = vunpack.c.l.s4 1934713408
        %v1918 = vunpack.c.0.s8 %v1917
        %v1919 = vlaneseq
        %v1920 = vshrl.u32 %v1919, 7
        %v1921 = vsub.s32 %v1918, %v1920
        %v1922 = vrot.slane %v1908, %v1921
        %v1923 = vcombine.low %v1899, %v1915
        %v1924 = vcombine.high %v1899, %v1915
        %v1925 = vcombine.low %v1906, %v1922
        %v1926 = vcombine.high %v1906, %v1922
        %1928 = vrot.lane.b32.xlu0 %v1924, 8
        %v1929 = vpop.permute.xlu0 %1928
        %1932 = vrot.lane.b32.xlu0 %v1925, 16
        %v1933 = vpop.permute.xlu0 %1932
        %1936 = vrot.lane.b32.xlu0 %v1926, 24
        %v1937 = vpop.permute.xlu0 %1936
        %v1939 = vsel %vm1138, %v1923, %v1929
        %vm1940 = vcmask 130048
        %v1941 = vsel %vm1940, %v1939, %v1933
        %vm1942 = vcmask 195584
        %v1943 = vsel %vm1942, %v1941, %v1937
        %v1944 = vadd.f32 %v909, %v1943
        %v1945 = vld [vmem:[%s4] sm:$0x1]
        %v1946 = vld [vmem:[%s5] sm:$0x1]
        %v1947 = vsel %vm914, %v1944, 0.0
        %1948 = vadd.xlane.f32.xlu0 %v1947
        %v1949 = vpop.xlane.xlu0 %1948
        %v1950 = vrcp.pop 32.0
        %v1951 = vmul.f32 %v1949, %v1950
        %v1952 = vsub.f32 %v1944, %v1951
        %v1953 = vmul.f32 %v1952, %v1952
        %v1954 = vsel %vm914, %v1953, 0.0
        %1955 = vadd.xlane.f32.xlu0 %v1954
        %v1956 = vpop.xlane.xlu0 %1955
        %v1957 = vmul.f32 %v1956, %v1950
        %v1958 = vadd.f32 %v1957, 1e-05
        %v1959 = vrsqrt.pop %v1958
        %v1960 = vmul.f32 %v1952, %v1959
        %v1962 = vlaneseq
        %v1963 = vshrl.u32 %v1962, 7
        %v1964 = vsub.s32 0, %v1963
        %v1965 = vrot.slane %v1945, %v1964
        %v1967 = vmul.f32 %v1960, %v1965
        %v1969 = vlaneseq
        %v1970 = vshrl.u32 %v1969, 7
        %v1971 = vsub.s32 0, %v1970
        %v1972 = vrot.slane %v1946, %v1971
        %v1974 = vadd.f32 %v1967, %v1972
        %v1975 = vld [vmem:[%s6] sm:$0xff]
        %v1976 = vld [vmem:[%s6 + $0x8] sm:$0xff]
        %v1977 = vld [vmem:[%s6 + $0x10] sm:$0xff]
        %v1978 = vld [vmem:[%s6 + $0x18] sm:$0xff]
        %v1979 = vld [vmem:[%s7] sm:$0x1]
        %v1981 = vlaneseq
        %v1982 = vshrl.u32 %v1981, 7
        %v1983 = vsub.s32 0, %v1982
        %v1984 = vrot.slane %v1979, %v1983
        %v1987 = vsel %vm914, %v1974, 0
        %1989 = vmatprep.subr.mxu0 0.0
        %1990 = vmatpush1.msra.mxu0 0.0
        %1991 = vmatprep.subr.mxu0 0.0
        %1992 = vmatpush1.msra.mxu0 0.0
        %1993 = vmatprep.subr.mxu0 0.0
        %1994 = vmatpush1.msra.mxu0 0.0
        %1995 = vmatprep.subr.mxu0 0.0
        %1996 = vmatpush1.msra.mxu0 0.0
        %1997 = vmatprep.subr.mxu0 0.0
        %1998 = vmatpush1.msra.mxu0 0.0
        %1999 = vmatprep.subr.mxu0 0.0
        %2000 = vmatpush1.msra.mxu0 0.0
        %2001 = vmatprep.subr.mxu0 0.0
        %2002 = vmatpush1.msra.mxu0 0.0
        %2003 = vmatprep.subr.mxu0 0.0
        %2004 = vmatpush1.msra.mxu0 0.0
        %2005 = vmatprep.subr.mxu0 0.0
        %2006 = vmatpush1.msra.mxu0 0.0
        %2007 = vmatprep.subr.mxu0 0.0
        %2008 = vmatpush1.msra.mxu0 0.0
        %2009 = vmatprep.subr.mxu0 0.0
        %2010 = vmatpush1.msra.mxu0 0.0
        %2011 = vmatprep.subr.mxu0 0.0
        %2012 = vmatpush1.msra.mxu0 0.0
        %2013 = vmatprep.subr.mxu0 0.0
        %2014 = vmatpush1.msra.mxu0 %v1978
        %2015 = vmatprep.subr.mxu0 0.0
        %2016 = vmatpush1.msra.mxu0 %v1977
        %2017 = vmatprep.subr.mxu0 0.0
        %2018 = vmatpush1.msra.mxu0 %v1976
        %2019 = vmatprep.subr.mxu0 0.0
        %2020 = vmatpush1.msra.mxu0 %v1975
        %2021 = vmatprep.subr.mxu0 0.0
        %2022 = vmatpush2.msra.mxu0 0.0
        %2023 = vmatprep.subr.mxu0 0.0
        %2024 = vmatpush2.msra.mxu0 0.0
        %2025 = vmatprep.subr.mxu0 0.0
        %2026 = vmatpush2.msra.mxu0 0.0
        %2027 = vmatprep.subr.mxu0 0.0
        %2028 = vmatpush2.msra.mxu0 0.0
        %2029 = vmatprep.subr.mxu0 0.0
        %2030 = vmatpush2.msra.mxu0 0.0
        %2031 = vmatprep.subr.mxu0 0.0
        %2032 = vmatpush2.msra.mxu0 0.0
        %2033 = vmatprep.subr.mxu0 0.0
        %2034 = vmatpush2.msra.mxu0 0.0
        %2035 = vmatprep.subr.mxu0 0.0
        %2036 = vmatpush2.msra.mxu0 0.0
        %2037 = vmatprep.subr.mxu0 0.0
        %2038 = vmatpush2.msra.mxu0 0.0
        %2039 = vmatprep.subr.mxu0 0.0
        %2040 = vmatpush2.msra.mxu0 0.0
        %2041 = vmatprep.subr.mxu0 0.0
        %2042 = vmatpush2.msra.mxu0 0.0
        %2043 = vmatprep.subr.mxu0 0.0
        %2044 = vmatpush2.msra.mxu0 0.0
        %2045 = vmatprep.subr.mxu0 0.0
        %2046 = vmatpush2.msra.mxu0 0.0
        %2047 = vmatprep.subr.mxu0 0.0
        %2048 = vmatpush2.msra.mxu0 0.0
        %2049 = vmatprep.subr.mxu0 0.0
        %2050 = vmatpush2.msra.mxu0 0.0
        %2051 = vmatprep.subr.mxu0 0.0
        %2052 = vmatpush2.msra.mxu0 0.0
        %2053 = vmatprep.mubr.f32.mxu0 0.0
        %2054 = vmatmul.mubr.f32.gmra.mxu0 %v1987
        %v2055 = vpop.f32.mrf.mxu0
        %v2056 = vadd.f32 %v1984, %v2055
        %v2057 = vpop.f32.mrf.mxu0
        %2058 = vdwg.mxu0
        %v2059 = vmax.f32 %v2056, 0.0
        %v2060 = vld [vmem:[%s8] sm:$0xff]
        %v2061 = vld [vmem:[%s8 + $0x8] sm:$0xff]
        %v2062 = vld [vmem:[%s8 + $0x10] sm:$0xff]
        %v2063 = vld [vmem:[%s8 + $0x18] sm:$0xff]
        %v2064 = vld [vmem:[%s8 + $0x20] sm:$0xff]
        %v2065 = vld [vmem:[%s8 + $0x28] sm:$0xff]
        %v2066 = vld [vmem:[%s8 + $0x30] sm:$0xff]
        %v2067 = vld [vmem:[%s8 + $0x38] sm:$0xff]
        %v2068 = vld [vmem:[%s9] sm:$0x1]
        %v2070 = vlaneseq
        %v2071 = vshrl.u32 %v2070, 7
        %v2072 = vsub.s32 0, %v2071
        %v2073 = vrot.slane %v2068, %v2072
        %vm2075 = vcmask 523264
        %v2077 = vsel %vm2075, %v2059, 0
        %2079 = vmatprep.subr.mxu0 0.0
        %2080 = vmatpush1.msra.mxu0 0.0
        %2081 = vmatprep.subr.mxu0 0.0
        %2082 = vmatpush1.msra.mxu0 0.0
        %2083 = vmatprep.subr.mxu0 0.0
        %2084 = vmatpush1.msra.mxu0 0.0
        %2085 = vmatprep.subr.mxu0 0.0
        %2086 = vmatpush1.msra.mxu0 0.0
        %2087 = vmatprep.subr.mxu0 0.0
        %2088 = vmatpush1.msra.mxu0 0.0
        %2089 = vmatprep.subr.mxu0 0.0
        %2090 = vmatpush1.msra.mxu0 0.0
        %2091 = vmatprep.subr.mxu0 0.0
        %2092 = vmatpush1.msra.mxu0 0.0
        %2093 = vmatprep.subr.mxu0 0.0
        %2094 = vmatpush1.msra.mxu0 0.0
        %2095 = vmatprep.subr.mxu0 0.0
        %2096 = vmatpush1.msra.mxu0 %v2067
        %2097 = vmatprep.subr.mxu0 0.0
        %2098 = vmatpush1.msra.mxu0 %v2066
        %2099 = vmatprep.subr.mxu0 0.0
        %2100 = vmatpush1.msra.mxu0 %v2065
        %2101 = vmatprep.subr.mxu0 0.0
        %2102 = vmatpush1.msra.mxu0 %v2064
        %2103 = vmatprep.subr.mxu0 0.0
        %2104 = vmatpush1.msra.mxu0 %v2063
        %2105 = vmatprep.subr.mxu0 0.0
        %2106 = vmatpush1.msra.mxu0 %v2062
        %2107 = vmatprep.subr.mxu0 0.0
        %2108 = vmatpush1.msra.mxu0 %v2061
        %2109 = vmatprep.subr.mxu0 0.0
        %2110 = vmatpush1.msra.mxu0 %v2060
        %2111 = vmatprep.subr.mxu0 0.0
        %2112 = vmatpush2.msra.mxu0 0.0
        %2113 = vmatprep.subr.mxu0 0.0
        %2114 = vmatpush2.msra.mxu0 0.0
        %2115 = vmatprep.subr.mxu0 0.0
        %2116 = vmatpush2.msra.mxu0 0.0
        %2117 = vmatprep.subr.mxu0 0.0
        %2118 = vmatpush2.msra.mxu0 0.0
        %2119 = vmatprep.subr.mxu0 0.0
        %2120 = vmatpush2.msra.mxu0 0.0
        %2121 = vmatprep.subr.mxu0 0.0
        %2122 = vmatpush2.msra.mxu0 0.0
        %2123 = vmatprep.subr.mxu0 0.0
        %2124 = vmatpush2.msra.mxu0 0.0
        %2125 = vmatprep.subr.mxu0 0.0
        %2126 = vmatpush2.msra.mxu0 0.0
        %2127 = vmatprep.subr.mxu0 0.0
        %2128 = vmatpush2.msra.mxu0 0.0
        %2129 = vmatprep.subr.mxu0 0.0
        %2130 = vmatpush2.msra.mxu0 0.0
        %2131 = vmatprep.subr.mxu0 0.0
        %2132 = vmatpush2.msra.mxu0 0.0
        %2133 = vmatprep.subr.mxu0 0.0
        %2134 = vmatpush2.msra.mxu0 0.0
        %2135 = vmatprep.subr.mxu0 0.0
        %2136 = vmatpush2.msra.mxu0 0.0
        %2137 = vmatprep.subr.mxu0 0.0
        %2138 = vmatpush2.msra.mxu0 0.0
        %2139 = vmatprep.subr.mxu0 0.0
        %2140 = vmatpush2.msra.mxu0 0.0
        %2141 = vmatprep.subr.mxu0 0.0
        %2142 = vmatpush2.msra.mxu0 0.0
        %2143 = vmatprep.mubr.f32.mxu0 0.0
        %2144 = vmatmul.mubr.f32.gmra.mxu0 %v2077
        %v2145 = vpop.f32.mrf.mxu0
        %v2146 = vadd.f32 %v2073, %v2145
        %v2147 = vpop.f32.mrf.mxu0
        %2148 = vdwg.mxu0
        %v2149 = vadd.f32 %v1974, %v2146
        %v2150 = vld [vmem:[%s10] sm:$0x1]
        %v2151 = vld [vmem:[%s11] sm:$0x1]
        %v2152 = vsel %vm914, %v2149, 0.0
        %2153 = vadd.xlane.f32.xlu0 %v2152
        %v2154 = vpop.xlane.xlu0 %2153
        %v2155 = vmul.f32 %v2154, %v1950
        %v2156 = vsub.f32 %v2149, %v2155
        %v2157 = vmul.f32 %v2156, %v2156
        %v2158 = vsel %vm914, %v2157, 0.0
        %2159 = vadd.xlane.f32.xlu0 %v2158
        %v2160 = vpop.xlane.xlu0 %2159
        %v2161 = vmul.f32 %v2160, %v1950
        %v2162 = vadd.f32 %v2161, 1e-05
        %v2163 = vrsqrt.pop %v2162
        %v2164 = vmul.f32 %v2156, %v2163
        %v2166 = vlaneseq
        %v2167 = vshrl.u32 %v2166, 7
        %v2168 = vsub.s32 0, %v2167
        %v2169 = vrot.slane %v2150, %v2168
        %v2171 = vmul.f32 %v2164, %v2169
        %v2173 = vlaneseq
        %v2174 = vshrl.u32 %v2173, 7
        %v2175 = vsub.s32 0, %v2174
        %v2176 = vrot.slane %v2151, %v2175
        %v2178 = vadd.f32 %v2171, %v2176
        %2179 = vst.msk [vmem:[%s515] sm:$0xff] %vm914, %v2178
        %s2180 = sand.u32 %s323, 1
        %s2181 = scalar_lea.sflag [#allocation6], %s2180
        %s2182 = sand.u32 %s323, 1
        %s2183 = smul.addr %s2182, 8
        %s2184 = scalar_lea.vmem [#allocation9], %s2183
        %s2185 = sand.u32 %s351, 1
        %s2186 = scalar_lea.sflag [#allocation11], %s2185
        %s2187 = sand.u32 %s351, 1
        %s2188 = smul.addr %s2187, 32
        %s2189 = scalar_lea.vmem [#allocation10], %s2188
        // Predicated region
        $region81: #{tpu_custom_call.1} parent=67 // pred_check
          %p2190 = pneg %p333
        $region82: #{tpu_custom_call.1} parent=67 // pred_check_branch
          %2192 = sbr.rel (%p2190) target = $region84
        $region83: #{tpu_custom_call.1} parent=67 // pred_region
          %s2194 = ssub.s32 128, 128
          %2195 = vsyncadd %s2181, %s2194
          %s2196 = sadd.s32 %s42, %s41
          %s2197 = smul.addr %s2196, 128
          %s2198 = scalar_lea.hbm %s12, %s2197
          %s2200 = sshll.u32 %s2184, 4
          %s2201 = int_to_ptr.vmem [resolvable:$true] %s2200
          %2203 = dma.vmem_to_hbm [thread:$0]  %s2201, 128, %s2198, %s2181
        $region84: #{tpu_custom_call.1} parent=67 // pred_fallthru
          _
        // Predicated region
        $region85: #{tpu_custom_call.1} parent=67 // pred_check
          %p2204 = pneg %p361
        $region86: #{tpu_custom_call.1} parent=67 // pred_check_branch
          %2206 = sbr.rel (%p2204) target = $region88
        $region87: #{tpu_custom_call.1} parent=67 // pred_region
          %s2208 = ssub.s32 512, 512
          %2209 = vsyncadd %s2186, %s2208
          %s2210 = smul.addr %s41, 4
          %s2211 = sadd.s32 %s42, %s2210
          %s2212 = smul.addr %s2211, 128
          %s2213 = scalar_lea.hbm %s13, %s2212
          %s2214 = sshll.u32 %s2189, 4
          %s2215 = int_to_ptr.vmem [resolvable:$true] %s2214
          %2220 = dma.vmem_to_hbm [thread:$0]  %s2215, 512, %s2213, %s2186, 128, 128, 8
        $region88: #{tpu_custom_call.1} parent=67 // pred_fallthru
          _
      $region68: #{tpu_custom_call.1} parent=5 // pred_fallthru
        _
      %p2221 = scmp.le.s32.totalorder 2, %s32
      // Predicated region
      $region89: #{tpu_custom_call.1} parent=5 // pred_check
        %p2222 = pneg %p2221
      $region90: #{tpu_custom_call.1} parent=5 // pred_check_branch
        %2224 = sbr.rel (%p2222) target = $region92
      $region91: #{tpu_custom_call.1} parent=5 // pred_region
        %s2225 = ssub.s32 %s32, 2
        // Predicated region
        $region93: #{tpu_custom_call.1} parent=91 // pred_check
          %p2226 = pneg %p339
        $region94: #{tpu_custom_call.1} parent=91 // pred_check_branch
          %2228 = sbr.rel (%p2226) target = $region96
        $region95: #{tpu_custom_call.1} parent=91 // pred_region
          %s2229 = sand.u32 %s324, 1
          %s2230 = scalar_lea.sflag [#allocation6], %s2229
          %s2231 = sand.u32 %s324, 1
          %s2232 = smul.addr %s2231, 8
          %s2233 = scalar_lea.vmem [#allocation9], %s2232
          %2234 = dma.done %s2230, 128
        $region96: #{tpu_custom_call.1} parent=91 // pred_fallthru
          _
        // Predicated region
        $region97: #{tpu_custom_call.1} parent=91 // pred_check
          %p2235 = pneg %p367
        $region98: #{tpu_custom_call.1} parent=91 // pred_check_branch
          %2237 = sbr.rel (%p2235) target = $region100
        $region99: #{tpu_custom_call.1} parent=91 // pred_region
          %s2238 = sand.u32 %s352, 1
          %s2239 = scalar_lea.sflag [#allocation11], %s2238
          %s2240 = sand.u32 %s352, 1
          %s2241 = smul.addr %s2240, 32
          %s2242 = scalar_lea.vmem [#allocation10], %s2241
          %2243 = dma.done %s2239, 512
        $region100: #{tpu_custom_call.1} parent=91 // pred_fallthru
          _
      $region92: #{tpu_custom_call.1} parent=5 // pred_fallthru
        _
    $region6: #{tpu_custom_call.1} parent=1 // loop_footer
      %s36 = sadd.s32 1, %s32
    $region7: #{tpu_custom_call.1} parent=1 // loop_footer_branch
      %31 = sbr.rel target = $region3
    $region8: #{tpu_custom_call.1} parent=1 // loop_exit
      _
    %2244 = vsyncpa [#allocation5], 1
    %s2245 = scalar_lea.sflag [#allocation5], 1
    %2246 = vsyncpa %s2245, 1
    %2247 = vsyncpa [#allocation8], 1
    %s2248 = scalar_lea.sflag [#allocation8], 1
    %2249 = vsyncpa %s2248, 1
    %2250 = vsyncpa [#allocation6], 1
    %s2251 = scalar_lea.sflag [#allocation6], 1
    %2252 = vsyncpa %s2251, 1
    %2253 = vsyncpa [#allocation11], 1
    %s2254 = scalar_lea.sflag [#allocation11], 1
    %2255 = vsyncpa %s2254, 1

</llo_original>
